<compile_context>
chip_gen: v6e
topology: v6e:2x2x1
jax: 0.10.0
libtpu: 0.0.40
codegen_flags: <defaults>
</compile_context>

<pallas_src>
import jax
import jax.numpy as jnp
from jax.experimental import pallas as pl
from jax.experimental.pallas import tpu as pltpu


def _round_up(x, m):
    return (x + m - 1) // m * m


def _make_decoder_lstm_kernel(num_layers, hidden, batch_pad, seq_len):
    """Build a fused multi-layer LSTM kernel for static (L, H, B_pad, T)."""
    H, B, T = hidden, batch_pad, seq_len
    # Unroll factor for the serial recurrence: full unroll for small T, a
    # bounded unroll otherwise (keeps LLO scheduler visibility without blowing
    # vreg live ranges).
    unroll = True if T <= 16 else 8

    def kernel(*refs):
        # refs = [x2d, (w_ih, w_hh, bias) * L, out, xg_scr, seq_scr]
        x_ref = refs[0]
        w_refs = refs[1:1 + 3 * num_layers]
        out_ref = refs[1 + 3 * num_layers]
        xg_scr = refs[1 + 3 * num_layers + 1]   # (T*B, 4H) hoisted input proj
        seq_scr = refs[1 + 3 * num_layers + 2]  # (T*B, H)  inter-layer acts

        for layer in range(num_layers):
            wih_ref = w_refs[3 * layer + 0]   # (In_l, 4H)  (pre-transposed)
            whh_ref = w_refs[3 * layer + 1]   # (H,   4H)  (pre-transposed)
            b_ref = w_refs[3 * layer + 2]     # (1,   4H)  (b_ih + b_hh)

            layer_in = x_ref[...] if layer == 0 else seq_scr[...]
            # Last layer writes directly into out_ref: no final slab copy.
            dst = out_ref if layer == num_layers - 1 else seq_scr

            # Hoisted input projection for all T timesteps in one matmul.
            xg_scr[...] = (
                jnp.dot(layer_in, wih_ref[...],
                        preferred_element_type=jnp.float32)
                + b_ref[...]
            )

            whh = whh_ref[...]   # read once per layer, stays in vregs/VMEM

            def step(t, carry):
                h, c = carry
                # B is padded to a multiple of 8 sublanes -> aligned full tiles.
                row = pl.multiple_of(t * B, 8)
                gates = xg_scr[pl.ds(row, B), :] + jnp.dot(
                    h, whh, preferred_element_type=jnp.float32)   # (B, 4H)
                # Full-width activations (2 EUP passes), then lane slices of
                # the activated values.  PyTorch gate order: i, f, g, o.
                sig = jax.nn.sigmoid(gates)
                th = jnp.tanh(gates)
                i_g = sig[:, 0 * H:1 * H]
                f_g = sig[:, 1 * H:2 * H]
                g_g = th[:, 2 * H:3 * H]
                o_g = sig[:, 3 * H:4 * H]
                c_new = f_g * c + i_g * g_g
                h_new = o_g * jnp.tanh(c_new)
                dst[pl.ds(row, B), :] = h_new
                return h_new, c_new

            h0 = jnp.zeros((B, H), jnp.float32)
            c0 = jnp.zeros((B, H), jnp.float32)
            _ = jax.lax.fori_loop(0, T, step, (h0, c0), unroll=unroll)

    return kernel


def _decoder_lstm_pallas(x_btd, params):
    """Run the fused multi-layer LSTM.

    x_btd:  (B, T, In0) float32, batch_first (PyTorch nn.LSTM layout).
    params: list of (w_ih (4H,In), w_hh (4H,H), b_ih (4H,), b_hh (4H,)).
    returns (B, T, H) float32.
    """
    B, T, In0 = x_btd.shape
    H = params[0][1].shape[1]
    L = len(params)
    B_pad = _round_up(max(B, 1), 8)

    # time-major, batch padded to a full 8-sublane tile; row t*B_pad + b.
    # TODO(synk): keep the op time-major end-to-end (or fold layout into a
    #             T-chunk grid index_map) to drop these wrapper-side copies.
    x_tbd = jnp.transpose(x_btd, (1, 0, 2))              # (T, B, In0)
    if B_pad != B:
        x_tbd = jnp.pad(x_tbd, ((0, 0), (0, B_pad - B), (0, 0)))
    x2d = x_tbd.reshape(T * B_pad, In0)

    flat = []
    for (w_ih, w_hh, b_ih, b_hh) in params:
        flat.append(jnp.asarray(w_ih.T, jnp.float32))                   # (In, 4H)
        flat.append(jnp.asarray(w_hh.T, jnp.float32))                   # (H, 4H)
        flat.append(jnp.asarray((b_ih + b_hh)[None, :], jnp.float32))   # (1, 4H)

    kernel = _make_decoder_lstm_kernel(L, H, B_pad, T)
    vmem = pl.BlockSpec(memory_space=pltpu.MemorySpace.VMEM)

    # Real resident VMEM footprint (+ headroom); everything lives at once.
    f32 = 4
    data_bytes = (
        x2d.size * f32
        + sum(int(a.size) * f32 for a in flat)
        + T * B_pad * H * f32              # out
        + T * B_pad * 4 * H * f32          # xg scratch
        + T * B_pad * H * f32              # seq scratch
    )
    vmem_limit = int(min(max(4 * data_bytes, 16 << 20), 64 << 20))

    out2d = pl.pallas_call(
        kernel,
        out_shape=jax.ShapeDtypeStruct((T * B_pad, H), jnp.float32),
        in_specs=[vmem] * (1 + 3 * L),
        out_specs=vmem,
        scratch_shapes=[
            pltpu.VMEM((T * B_pad, 4 * H), jnp.float32),  # hoisted input projection
            pltpu.VMEM((T * B_pad, H), jnp.float32),      # inter-layer activations
        ],
        compiler_params=pltpu.CompilerParams(vmem_limit_bytes=vmem_limit),
    )(x2d, *flat)

    out = out2d.reshape(T, B_pad, H)[:, :B, :]            # drop batch padding
    return jnp.transpose(out, (1, 0, 2))                  # (B, T, H)


class DecoderLSTMPallas:
    """JAX/Pallas equivalent of DecoderLSTM.forward (inference semantics)."""

    def __init__(self, config, key):
        self.input_size = config["DecoderLSTM_input_size"]
        self.hidden_size = config["DecoderLSTM_hidden_size"]
        self.num_layers = config["DecoderLSTM_num_layers"]
        self.dropout_p = config["DecoderLSTM_dropout_p"]

        H = self.hidden_size
        bound = 1.0 / (H ** 0.5)
        self.params = []
        for layer in range(self.num_layers):
            in_sz = self.input_size if layer == 0 else H
            key, k1, k2, k3, k4 = jax.random.split(key, 5)
            w_ih = jax.random.uniform(k1, (4 * H, in_sz), jnp.float32, -bound, bound)
            w_hh = jax.random.uniform(k2, (4 * H, H), jnp.float32, -bound, bound)
            b_ih = jax.random.uniform(k3, (4 * H,), jnp.float32, -bound, bound)
            b_hh = jax.random.uniform(k4, (4 * H,), jnp.float32, -bound, bound)
            self.params.append((w_ih, w_hh, b_ih, b_hh))

    def __call__(self, x):
        # Mirror: if x.ndim < 3: x = x.unsqueeze(dim=2)
        if x.ndim < 3:
            x = x[:, :, None]
        x = jnp.asarray(x, jnp.float32)                 # (B, T, In), batch_first
        out = _decoder_lstm_pallas(x, self.params)      # (B, T, H)
        # nn.Dropout in eval mode is identity.
        return out


def _reference_lstm(x, params, hidden_size):
    """Pure-JAX reference for correctness checking."""
    x = jnp.transpose(jnp.asarray(x, jnp.float32), (1, 0, 2))  # (T, B, In)
    for (w_ih, w_hh, b_ih, b_hh) in params:
        T, B, _ = x.shape
        H = hidden_size

        def step(carry, x_t):
            h, c = carry
            gates = x_t @ w_ih.T + h @ w_hh.T + b_ih + b_hh
            i = jax.nn.sigmoid(gates[:, 0 * H:1 * H])
            f = jax.nn.sigmoid(gates[:, 1 * H:2 * H])
            g = jnp.tanh(gates[:, 2 * H:3 * H])
            o = jax.nn.sigmoid(gates[:, 3 * H:4 * H])
            c = f * c + i * g
            h = o * jnp.tanh(c)
            return (h, c), h

        init = (jnp.zeros((B, H), jnp.float32), jnp.zeros((B, H), jnp.float32))
        _, ys = jax.lax.scan(step, init, x)
        x = ys
    return jnp.transpose(x, (1, 0, 2))


if __name__ == "__main__":
    config = {
        "DecoderLSTM_input_size": 8,
        "DecoderLSTM_hidden_size": 32,
        "DecoderLSTM_num_layers": 2,
        "DecoderLSTM_dropout_p": 0.1,
    }
    key = jax.random.PRNGKey(0)
    key, xkey = jax.random.split(key)

    B, T = 2, 8
    x = jax.random.normal(xkey, (B, T, config["DecoderLSTM_input_size"]), jnp.float32)

    model = DecoderLSTMPallas(config, key)
    out = model(x)
    out = jax.block_until_ready(out)

    ref = _reference_lstm(x, model.params, config["DecoderLSTM_hidden_size"])
    assert out.shape == (B, T, config["DecoderLSTM_hidden_size"])
    assert jnp.allclose(out, ref, atol=1e-5, rtol=1e-5), "mismatch vs reference"

    print("KERNEL_OK")
</pallas_src>

<mosaic_0001>
module attributes {stable_mosaic.version = 11 : i64} {
  func.func @kernel(%arg0: memref<64x8xf32, #tpu.memory_space<vmem>>, %arg1: memref<8x128xf32, #tpu.memory_space<vmem>>, %arg2: memref<32x128xf32, #tpu.memory_space<vmem>>, %arg3: memref<1x128xf32, #tpu.memory_space<vmem>>, %arg4: memref<32x128xf32, #tpu.memory_space<vmem>>, %arg5: memref<32x128xf32, #tpu.memory_space<vmem>>, %arg6: memref<1x128xf32, #tpu.memory_space<vmem>>, %arg7: memref<64x32xf32, #tpu.memory_space<vmem>>, %arg8: memref<64x128xf32, #tpu.memory_space<vmem>>, %arg9: memref<64x32xf32, #tpu.memory_space<vmem>>) attributes {dimension_semantics = [], scalar_prefetch = 0 : i64, scratch_operands = 2 : i64, tpu.core_type = #tpu.core_type<tc>} {
    %c0 = arith.constant 0 : index
    %c0_0 = arith.constant 0 : index
    %0 = vector.load %arg0[%c0, %c0_0] : memref<64x8xf32, #tpu.memory_space<vmem>>, vector<64x8xf32>
    %c0_1 = arith.constant 0 : index
    %c0_2 = arith.constant 0 : index
    %1 = vector.load %arg1[%c0_1, %c0_2] : memref<8x128xf32, #tpu.memory_space<vmem>>, vector<8x128xf32>
    %cst = arith.constant dense<0.000000e+00> : vector<64x128xf32>
    %2 = tpu.matmul %0, %1, %cst {dimension_numbers = #tpu.dot_dimension_numbers<[1], [0], [0], [1], [0, 0, 1, 1], [], []>} : vector<64x8xf32>, vector<8x128xf32>, vector<64x128xf32> -> vector<64x128xf32>
    %c0_3 = arith.constant 0 : index
    %c0_4 = arith.constant 0 : index
    %3 = vector.load %arg3[%c0_3, %c0_4] : memref<1x128xf32, #tpu.memory_space<vmem>>, vector<1x128xf32>
    %4 = vector.broadcast %3 : vector<1x128xf32> to vector<64x128xf32>
    %5 = arith.addf %2, %4 : vector<64x128xf32>
    %c0_5 = arith.constant 0 : index
    %c0_6 = arith.constant 0 : index
    %6 = vector.load %arg8[%c0_5, %c0_6] : memref<64x128xf32, #tpu.memory_space<vmem>>, vector<64x128xf32>
    tpu.vector_store %arg8[%c0_5, %c0_6], %5 {strides = array<i32>} : memref<64x128xf32, #tpu.memory_space<vmem>>, vector<64x128xf32>,
    %c0_7 = arith.constant 0 : index
    %c0_8 = arith.constant 0 : index
    %7 = vector.load %arg2[%c0_7, %c0_8] : memref<32x128xf32, #tpu.memory_space<vmem>>, vector<32x128xf32>
    %cst_9 = arith.constant 0.000000e+00 : f32
    %8 = vector.broadcast %cst_9 : f32 to vector<8x32xf32>
    %cst_10 = arith.constant 0.000000e+00 : f32
    %9 = vector.broadcast %cst_10 : f32 to vector<8x32xf32>
    %c0_i32 = arith.constant 0 : i32
    %c8_i32 = arith.constant 8 : i32
    %10 = arith.muli %c0_i32, %c8_i32 : i32
    %11 = tpu.assume_multiple %10, 8 : i32
    %12 = arith.index_cast %11 : i32 to index
    %c0_11 = arith.constant 0 : index
    %13 = vector.load %arg8[%12, %c0_11] : memref<64x128xf32, #tpu.memory_space<vmem>>, vector<8x128xf32>
    %cst_12 = arith.constant dense<0.000000e+00> : vector<8x128xf32>
    %14 = tpu.matmul %8, %7, %cst_12 {dimension_numbers = #tpu.dot_dimension_numbers<[1], [0], [0], [1], [0, 0, 1, 1], [], []>} : vector<8x32xf32>, vector<32x128xf32>, vector<8x128xf32> -> vector<8x128xf32>
    %15 = arith.addf %13, %14 : vector<8x128xf32>
    %16 = arith.negf %15 : vector<8x128xf32>
    %17 = math.exp %16 : vector<8x128xf32>
    %cst_13 = arith.constant 1.000000e+00 : f32
    %18 = vector.broadcast %cst_13 : f32 to vector<8x128xf32>
    %19 = arith.addf %18, %17 : vector<8x128xf32>
    %20 = arith.divf %18, %19 : vector<8x128xf32>
    %21 = math.tanh %15 : vector<8x128xf32>
    %22 = vector.extract_strided_slice %20 {offsets = [0, 0], sizes = [8, 32], strides = [1, 1]} : vector<8x128xf32> to vector<8x32xf32>
    %23 = vector.extract_strided_slice %20 {offsets = [0, 32], sizes = [8, 32], strides = [1, 1]} : vector<8x128xf32> to vector<8x32xf32>
    %24 = vector.extract_strided_slice %21 {offsets = [0, 64], sizes = [8, 32], strides = [1, 1]} : vector<8x128xf32> to vector<8x32xf32>
    %25 = vector.extract_strided_slice %20 {offsets = [0, 96], sizes = [8, 32], strides = [1, 1]} : vector<8x128xf32> to vector<8x32xf32>
    %26 = arith.mulf %23, %9 : vector<8x32xf32>
    %27 = arith.mulf %22, %24 : vector<8x32xf32>
    %28 = arith.addf %26, %27 : vector<8x32xf32>
    %29 = math.tanh %28 : vector<8x32xf32>
    %30 = arith.mulf %25, %29 : vector<8x32xf32>
    %31 = arith.index_cast %11 : i32 to index
    %c0_14 = arith.constant 0 : index
    %32 = vector.load %arg9[%31, %c0_14] : memref<64x32xf32, #tpu.memory_space<vmem>>, vector<8x32xf32>
    tpu.vector_store %arg9[%31, %c0_14], %30 {strides = array<i32>} : memref<64x32xf32, #tpu.memory_space<vmem>>, vector<8x32xf32>,
    %c1_i32 = arith.constant 1 : i32
    %c8_i32_15 = arith.constant 8 : i32
    %33 = arith.muli %c1_i32, %c8_i32_15 : i32
    %34 = tpu.assume_multiple %33, 8 : i32
    %35 = arith.index_cast %34 : i32 to index
    %c0_16 = arith.constant 0 : index
    %36 = vector.load %arg8[%35, %c0_16] : memref<64x128xf32, #tpu.memory_space<vmem>>, vector<8x128xf32>
    %cst_17 = arith.constant dense<0.000000e+00> : vector<8x128xf32>
    %37 = tpu.matmul %30, %7, %cst_17 {dimension_numbers = #tpu.dot_dimension_numbers<[1], [0], [0], [1], [0, 0, 1, 1], [], []>} : vector<8x32xf32>, vector<32x128xf32>, vector<8x128xf32> -> vector<8x128xf32>
    %38 = arith.addf %36, %37 : vector<8x128xf32>
    %39 = arith.negf %38 : vector<8x128xf32>
    %40 = math.exp %39 : vector<8x128xf32>
    %cst_18 = arith.constant 1.000000e+00 : f32
    %41 = vector.broadcast %cst_18 : f32 to vector<8x128xf32>
    %42 = arith.addf %41, %40 : vector<8x128xf32>
    %43 = arith.divf %41, %42 : vector<8x128xf32>
    %44 = math.tanh %38 : vector<8x128xf32>
    %45 = vector.extract_strided_slice %43 {offsets = [0, 0], sizes = [8, 32], strides = [1, 1]} : vector<8x128xf32> to vector<8x32xf32>
    %46 = vector.extract_strided_slice %43 {offsets = [0, 32], sizes = [8, 32], strides = [1, 1]} : vector<8x128xf32> to vector<8x32xf32>
    %47 = vector.extract_strided_slice %44 {offsets = [0, 64], sizes = [8, 32], strides = [1, 1]} : vector<8x128xf32> to vector<8x32xf32>
    %48 = vector.extract_strided_slice %43 {offsets = [0, 96], sizes = [8, 32], strides = [1, 1]} : vector<8x128xf32> to vector<8x32xf32>
    %49 = arith.mulf %46, %28 : vector<8x32xf32>
    %50 = arith.mulf %45, %47 : vector<8x32xf32>
    %51 = arith.addf %49, %50 : vector<8x32xf32>
    %52 = math.tanh %51 : vector<8x32xf32>
    %53 = arith.mulf %48, %52 : vector<8x32xf32>
    %54 = arith.index_cast %34 : i32 to index
    %c0_19 = arith.constant 0 : index
    %55 = vector.load %arg9[%54, %c0_19] : memref<64x32xf32, #tpu.memory_space<vmem>>, vector<8x32xf32>
    tpu.vector_store %arg9[%54, %c0_19], %53 {strides = array<i32>} : memref<64x32xf32, #tpu.memory_space<vmem>>, vector<8x32xf32>,
    %c2_i32 = arith.constant 2 : i32
    %c8_i32_20 = arith.constant 8 : i32
    %56 = arith.muli %c2_i32, %c8_i32_20 : i32
    %57 = tpu.assume_multiple %56, 8 : i32
    %58 = arith.index_cast %57 : i32 to index
    %c0_21 = arith.constant 0 : index
    %59 = vector.load %arg8[%58, %c0_21] : memref<64x128xf32, #tpu.memory_space<vmem>>, vector<8x128xf32>
    %cst_22 = arith.constant dense<0.000000e+00> : vector<8x128xf32>
    %60 = tpu.matmul %53, %7, %cst_22 {dimension_numbers = #tpu.dot_dimension_numbers<[1], [0], [0], [1], [0, 0, 1, 1], [], []>} : vector<8x32xf32>, vector<32x128xf32>, vector<8x128xf32> -> vector<8x128xf32>
    %61 = arith.addf %59, %60 : vector<8x128xf32>
    %62 = arith.negf %61 : vector<8x128xf32>
    %63 = math.exp %62 : vector<8x128xf32>
    %cst_23 = arith.constant 1.000000e+00 : f32
    %64 = vector.broadcast %cst_23 : f32 to vector<8x128xf32>
    %65 = arith.addf %64, %63 : vector<8x128xf32>
    %66 = arith.divf %64, %65 : vector<8x128xf32>
    %67 = math.tanh %61 : vector<8x128xf32>
    %68 = vector.extract_strided_slice %66 {offsets = [0, 0], sizes = [8, 32], strides = [1, 1]} : vector<8x128xf32> to vector<8x32xf32>
    %69 = vector.extract_strided_slice %66 {offsets = [0, 32], sizes = [8, 32], strides = [1, 1]} : vector<8x128xf32> to vector<8x32xf32>
    %70 = vector.extract_strided_slice %67 {offsets = [0, 64], sizes = [8, 32], strides = [1, 1]} : vector<8x128xf32> to vector<8x32xf32>
    %71 = vector.extract_strided_slice %66 {offsets = [0, 96], sizes = [8, 32], strides = [1, 1]} : vector<8x128xf32> to vector<8x32xf32>
    %72 = arith.mulf %69, %51 : vector<8x32xf32>
    %73 = arith.mulf %68, %70 : vector<8x32xf32>
    %74 = arith.addf %72, %73 : vector<8x32xf32>
    %75 = math.tanh %74 : vector<8x32xf32>
    %76 = arith.mulf %71, %75 : vector<8x32xf32>
    %77 = arith.index_cast %57 : i32 to index
    %c0_24 = arith.constant 0 : index
    %78 = vector.load %arg9[%77, %c0_24] : memref<64x32xf32, #tpu.memory_space<vmem>>, vector<8x32xf32>
    tpu.vector_store %arg9[%77, %c0_24], %76 {strides = array<i32>} : memref<64x32xf32, #tpu.memory_space<vmem>>, vector<8x32xf32>,
    %c3_i32 = arith.constant 3 : i32
    %c8_i32_25 = arith.constant 8 : i32
    %79 = arith.muli %c3_i32, %c8_i32_25 : i32
    %80 = tpu.assume_multiple %79, 8 : i32
    %81 = arith.index_cast %80 : i32 to index
    %c0_26 = arith.constant 0 : index
    %82 = vector.load %arg8[%81, %c0_26] : memref<64x128xf32, #tpu.memory_space<vmem>>, vector<8x128xf32>
    %cst_27 = arith.constant dense<0.000000e+00> : vector<8x128xf32>
    %83 = tpu.matmul %76, %7, %cst_27 {dimension_numbers = #tpu.dot_dimension_numbers<[1], [0], [0], [1], [0, 0, 1, 1], [], []>} : vector<8x32xf32>, vector<32x128xf32>, vector<8x128xf32> -> vector<8x128xf32>
    %84 = arith.addf %82, %83 : vector<8x128xf32>
    %85 = arith.negf %84 : vector<8x128xf32>
    %86 = math.exp %85 : vector<8x128xf32>
    %cst_28 = arith.constant 1.000000e+00 : f32
    %87 = vector.broadcast %cst_28 : f32 to vector<8x128xf32>
    %88 = arith.addf %87, %86 : vector<8x128xf32>
    %89 = arith.divf %87, %88 : vector<8x128xf32>
    %90 = math.tanh %84 : vector<8x128xf32>
    %91 = vector.extract_strided_slice %89 {offsets = [0, 0], sizes = [8, 32], strides = [1, 1]} : vector<8x128xf32> to vector<8x32xf32>
    %92 = vector.extract_strided_slice %89 {offsets = [0, 32], sizes = [8, 32], strides = [1, 1]} : vector<8x128xf32> to vector<8x32xf32>
    %93 = vector.extract_strided_slice %90 {offsets = [0, 64], sizes = [8, 32], strides = [1, 1]} : vector<8x128xf32> to vector<8x32xf32>
    %94 = vector.extract_strided_slice %89 {offsets = [0, 96], sizes = [8, 32], strides = [1, 1]} : vector<8x128xf32> to vector<8x32xf32>
    %95 = arith.mulf %92, %74 : vector<8x32xf32>
    %96 = arith.mulf %91, %93 : vector<8x32xf32>
    %97 = arith.addf %95, %96 : vector<8x32xf32>
    %98 = math.tanh %97 : vector<8x32xf32>
    %99 = arith.mulf %94, %98 : vector<8x32xf32>
    %100 = arith.index_cast %80 : i32 to index
    %c0_29 = arith.constant 0 : index
    %101 = vector.load %arg9[%100, %c0_29] : memref<64x32xf32, #tpu.memory_space<vmem>>, vector<8x32xf32>
    tpu.vector_store %arg9[%100, %c0_29], %99 {strides = array<i32>} : memref<64x32xf32, #tpu.memory_space<vmem>>, vector<8x32xf32>,
    %c4_i32 = arith.constant 4 : i32
    %c8_i32_30 = arith.constant 8 : i32
    %102 = arith.muli %c4_i32, %c8_i32_30 : i32
    %103 = tpu.assume_multiple %102, 8 : i32
    %104 = arith.index_cast %103 : i32 to index
    %c0_31 = arith.constant 0 : index
    %105 = vector.load %arg8[%104, %c0_31] : memref<64x128xf32, #tpu.memory_space<vmem>>, vector<8x128xf32>
    %cst_32 = arith.constant dense<0.000000e+00> : vector<8x128xf32>
    %106 = tpu.matmul %99, %7, %cst_32 {dimension_numbers = #tpu.dot_dimension_numbers<[1], [0], [0], [1], [0, 0, 1, 1], [], []>} : vector<8x32xf32>, vector<32x128xf32>, vector<8x128xf32> -> vector<8x128xf32>
    %107 = arith.addf %105, %106 : vector<8x128xf32>
    %108 = arith.negf %107 : vector<8x128xf32>
    %109 = math.exp %108 : vector<8x128xf32>
    %cst_33 = arith.constant 1.000000e+00 : f32
    %110 = vector.broadcast %cst_33 : f32 to vector<8x128xf32>
    %111 = arith.addf %110, %109 : vector<8x128xf32>
    %112 = arith.divf %110, %111 : vector<8x128xf32>
    %113 = math.tanh %107 : vector<8x128xf32>
    %114 = vector.extract_strided_slice %112 {offsets = [0, 0], sizes = [8, 32], strides = [1, 1]} : vector<8x128xf32> to vector<8x32xf32>
    %115 = vector.extract_strided_slice %112 {offsets = [0, 32], sizes = [8, 32], strides = [1, 1]} : vector<8x128xf32> to vector<8x32xf32>
    %116 = vector.extract_strided_slice %113 {offsets = [0, 64], sizes = [8, 32], strides = [1, 1]} : vector<8x128xf32> to vector<8x32xf32>
    %117 = vector.extract_strided_slice %112 {offsets = [0, 96], sizes = [8, 32], strides = [1, 1]} : vector<8x128xf32> to vector<8x32xf32>
    %118 = arith.mulf %115, %97 : vector<8x32xf32>
    %119 = arith.mulf %114, %116 : vector<8x32xf32>
    %120 = arith.addf %118, %119 : vector<8x32xf32>
    %121 = math.tanh %120 : vector<8x32xf32>
    %122 = arith.mulf %117, %121 : vector<8x32xf32>
    %123 = arith.index_cast %103 : i32 to index
    %c0_34 = arith.constant 0 : index
    %124 = vector.load %arg9[%123, %c0_34] : memref<64x32xf32, #tpu.memory_space<vmem>>, vector<8x32xf32>
    tpu.vector_store %arg9[%123, %c0_34], %122 {strides = array<i32>} : memref<64x32xf32, #tpu.memory_space<vmem>>, vector<8x32xf32>,
    %c5_i32 = arith.constant 5 : i32
    %c8_i32_35 = arith.constant 8 : i32
    %125 = arith.muli %c5_i32, %c8_i32_35 : i32
    %126 = tpu.assume_multiple %125, 8 : i32
    %127 = arith.index_cast %126 : i32 to index
    %c0_36 = arith.constant 0 : index
    %128 = vector.load %arg8[%127, %c0_36] : memref<64x128xf32, #tpu.memory_space<vmem>>, vector<8x128xf32>
    %cst_37 = arith.constant dense<0.000000e+00> : vector<8x128xf32>
    %129 = tpu.matmul %122, %7, %cst_37 {dimension_numbers = #tpu.dot_dimension_numbers<[1], [0], [0], [1], [0, 0, 1, 1], [], []>} : vector<8x32xf32>, vector<32x128xf32>, vector<8x128xf32> -> vector<8x128xf32>
    %130 = arith.addf %128, %129 : vector<8x128xf32>
    %131 = arith.negf %130 : vector<8x128xf32>
    %132 = math.exp %131 : vector<8x128xf32>
    %cst_38 = arith.constant 1.000000e+00 : f32
    %133 = vector.broadcast %cst_38 : f32 to vector<8x128xf32>
    %134 = arith.addf %133, %132 : vector<8x128xf32>
    %135 = arith.divf %133, %134 : vector<8x128xf32>
    %136 = math.tanh %130 : vector<8x128xf32>
    %137 = vector.extract_strided_slice %135 {offsets = [0, 0], sizes = [8, 32], strides = [1, 1]} : vector<8x128xf32> to vector<8x32xf32>
    %138 = vector.extract_strided_slice %135 {offsets = [0, 32], sizes = [8, 32], strides = [1, 1]} : vector<8x128xf32> to vector<8x32xf32>
    %139 = vector.extract_strided_slice %136 {offsets = [0, 64], sizes = [8, 32], strides = [1, 1]} : vector<8x128xf32> to vector<8x32xf32>
    %140 = vector.extract_strided_slice %135 {offsets = [0, 96], sizes = [8, 32], strides = [1, 1]} : vector<8x128xf32> to vector<8x32xf32>
    %141 = arith.mulf %138, %120 : vector<8x32xf32>
    %142 = arith.mulf %137, %139 : vector<8x32xf32>
    %143 = arith.addf %141, %142 : vector<8x32xf32>
    %144 = math.tanh %143 : vector<8x32xf32>
    %145 = arith.mulf %140, %144 : vector<8x32xf32>
    %146 = arith.index_cast %126 : i32 to index
    %c0_39 = arith.constant 0 : index
    %147 = vector.load %arg9[%146, %c0_39] : memref<64x32xf32, #tpu.memory_space<vmem>>, vector<8x32xf32>
    tpu.vector_store %arg9[%146, %c0_39], %145 {strides = array<i32>} : memref<64x32xf32, #tpu.memory_space<vmem>>, vector<8x32xf32>,
    %c6_i32 = arith.constant 6 : i32
    %c8_i32_40 = arith.constant 8 : i32
    %148 = arith.muli %c6_i32, %c8_i32_40 : i32
    %149 = tpu.assume_multiple %148, 8 : i32
    %150 = arith.index_cast %149 : i32 to index
    %c0_41 = arith.constant 0 : index
    %151 = vector.load %arg8[%150, %c0_41] : memref<64x128xf32, #tpu.memory_space<vmem>>, vector<8x128xf32>
    %cst_42 = arith.constant dense<0.000000e+00> : vector<8x128xf32>
    %152 = tpu.matmul %145, %7, %cst_42 {dimension_numbers = #tpu.dot_dimension_numbers<[1], [0], [0], [1], [0, 0, 1, 1], [], []>} : vector<8x32xf32>, vector<32x128xf32>, vector<8x128xf32> -> vector<8x128xf32>
    %153 = arith.addf %151, %152 : vector<8x128xf32>
    %154 = arith.negf %153 : vector<8x128xf32>
    %155 = math.exp %154 : vector<8x128xf32>
    %cst_43 = arith.constant 1.000000e+00 : f32
    %156 = vector.broadcast %cst_43 : f32 to vector<8x128xf32>
    %157 = arith.addf %156, %155 : vector<8x128xf32>
    %158 = arith.divf %156, %157 : vector<8x128xf32>
    %159 = math.tanh %153 : vector<8x128xf32>
    %160 = vector.extract_strided_slice %158 {offsets = [0, 0], sizes = [8, 32], strides = [1, 1]} : vector<8x128xf32> to vector<8x32xf32>
    %161 = vector.extract_strided_slice %158 {offsets = [0, 32], sizes = [8, 32], strides = [1, 1]} : vector<8x128xf32> to vector<8x32xf32>
    %162 = vector.extract_strided_slice %159 {offsets = [0, 64], sizes = [8, 32], strides = [1, 1]} : vector<8x128xf32> to vector<8x32xf32>
    %163 = vector.extract_strided_slice %158 {offsets = [0, 96], sizes = [8, 32], strides = [1, 1]} : vector<8x128xf32> to vector<8x32xf32>
    %164 = arith.mulf %161, %143 : vector<8x32xf32>
    %165 = arith.mulf %160, %162 : vector<8x32xf32>
    %166 = arith.addf %164, %165 : vector<8x32xf32>
    %167 = math.tanh %166 : vector<8x32xf32>
    %168 = arith.mulf %163, %167 : vector<8x32xf32>
    %169 = arith.index_cast %149 : i32 to index
    %c0_44 = arith.constant 0 : index
    %170 = vector.load %arg9[%169, %c0_44] : memref<64x32xf32, #tpu.memory_space<vmem>>, vector<8x32xf32>
    tpu.vector_store %arg9[%169, %c0_44], %168 {strides = array<i32>} : memref<64x32xf32, #tpu.memory_space<vmem>>, vector<8x32xf32>,
    %c7_i32 = arith.constant 7 : i32
    %c8_i32_45 = arith.constant 8 : i32
    %171 = arith.muli %c7_i32, %c8_i32_45 : i32
    %172 = tpu.assume_multiple %171, 8 : i32
    %173 = arith.index_cast %172 : i32 to index
    %c0_46 = arith.constant 0 : index
    %174 = vector.load %arg8[%173, %c0_46] : memref<64x128xf32, #tpu.memory_space<vmem>>, vector<8x128xf32>
    %cst_47 = arith.constant dense<0.000000e+00> : vector<8x128xf32>
    %175 = tpu.matmul %168, %7, %cst_47 {dimension_numbers = #tpu.dot_dimension_numbers<[1], [0], [0], [1], [0, 0, 1, 1], [], []>} : vector<8x32xf32>, vector<32x128xf32>, vector<8x128xf32> -> vector<8x128xf32>
    %176 = arith.addf %174, %175 : vector<8x128xf32>
    %177 = arith.negf %176 : vector<8x128xf32>
    %178 = math.exp %177 : vector<8x128xf32>
    %cst_48 = arith.constant 1.000000e+00 : f32
    %179 = vector.broadcast %cst_48 : f32 to vector<8x128xf32>
    %180 = arith.addf %179, %178 : vector<8x128xf32>
    %181 = arith.divf %179, %180 : vector<8x128xf32>
    %182 = math.tanh %176 : vector<8x128xf32>
    %183 = vector.extract_strided_slice %181 {offsets = [0, 0], sizes = [8, 32], strides = [1, 1]} : vector<8x128xf32> to vector<8x32xf32>
    %184 = vector.extract_strided_slice %181 {offsets = [0, 32], sizes = [8, 32], strides = [1, 1]} : vector<8x128xf32> to vector<8x32xf32>
    %185 = vector.extract_strided_slice %182 {offsets = [0, 64], sizes = [8, 32], strides = [1, 1]} : vector<8x128xf32> to vector<8x32xf32>
    %186 = vector.extract_strided_slice %181 {offsets = [0, 96], sizes = [8, 32], strides = [1, 1]} : vector<8x128xf32> to vector<8x32xf32>
    %187 = arith.mulf %184, %166 : vector<8x32xf32>
    %188 = arith.mulf %183, %185 : vector<8x32xf32>
    %189 = arith.addf %187, %188 : vector<8x32xf32>
    %190 = math.tanh %189 : vector<8x32xf32>
    %191 = arith.mulf %186, %190 : vector<8x32xf32>
    %192 = arith.index_cast %172 : i32 to index
    %c0_49 = arith.constant 0 : index
    %193 = vector.load %arg9[%192, %c0_49] : memref<64x32xf32, #tpu.memory_space<vmem>>, vector<8x32xf32>
    tpu.vector_store %arg9[%192, %c0_49], %191 {strides = array<i32>} : memref<64x32xf32, #tpu.memory_space<vmem>>, vector<8x32xf32>,
    %c8_i32_50 = arith.constant 8 : i32
    %c0_51 = arith.constant 0 : index
    %c0_52 = arith.constant 0 : index
    %194 = vector.load %arg9[%c0_51, %c0_52] : memref<64x32xf32, #tpu.memory_space<vmem>>, vector<64x32xf32>
    %c0_53 = arith.constant 0 : index
    %c0_54 = arith.constant 0 : index
    %195 = vector.load %arg4[%c0_53, %c0_54] : memref<32x128xf32, #tpu.memory_space<vmem>>, vector<32x128xf32>
    %cst_55 = arith.constant dense<0.000000e+00> : vector<64x128xf32>
    %196 = tpu.matmul %194, %195, %cst_55 {dimension_numbers = #tpu.dot_dimension_numbers<[1], [0], [0], [1], [0, 0, 1, 1], [], []>} : vector<64x32xf32>, vector<32x128xf32>, vector<64x128xf32> -> vector<64x128xf32>
    %c0_56 = arith.constant 0 : index
    %c0_57 = arith.constant 0 : index
    %197 = vector.load %arg6[%c0_56, %c0_57] : memref<1x128xf32, #tpu.memory_space<vmem>>, vector<1x128xf32>
    %198 = vector.broadcast %197 : vector<1x128xf32> to vector<64x128xf32>
    %199 = arith.addf %196, %198 : vector<64x128xf32>
    %c0_58 = arith.constant 0 : index
    %c0_59 = arith.constant 0 : index
    %200 = vector.load %arg8[%c0_58, %c0_59] : memref<64x128xf32, #tpu.memory_space<vmem>>, vector<64x128xf32>
    tpu.vector_store %arg8[%c0_58, %c0_59], %199 {strides = array<i32>} : memref<64x128xf32, #tpu.memory_space<vmem>>, vector<64x128xf32>,
    %c0_60 = arith.constant 0 : index
    %c0_61 = arith.constant 0 : index
    %201 = vector.load %arg5[%c0_60, %c0_61] : memref<32x128xf32, #tpu.memory_space<vmem>>, vector<32x128xf32>
    %cst_62 = arith.constant 0.000000e+00 : f32
    %202 = vector.broadcast %cst_62 : f32 to vector<8x32xf32>
    %cst_63 = arith.constant 0.000000e+00 : f32
    %203 = vector.broadcast %cst_63 : f32 to vector<8x32xf32>
    %c0_i32_64 = arith.constant 0 : i32
    %c8_i32_65 = arith.constant 8 : i32
    %204 = arith.muli %c0_i32_64, %c8_i32_65 : i32
    %205 = tpu.assume_multiple %204, 8 : i32
    %206 = arith.index_cast %205 : i32 to index
    %c0_66 = arith.constant 0 : index
    %207 = vector.load %arg8[%206, %c0_66] : memref<64x128xf32, #tpu.memory_space<vmem>>, vector<8x128xf32>
    %cst_67 = arith.constant dense<0.000000e+00> : vector<8x128xf32>
    %208 = tpu.matmul %202, %201, %cst_67 {dimension_numbers = #tpu.dot_dimension_numbers<[1], [0], [0], [1], [0, 0, 1, 1], [], []>} : vector<8x32xf32>, vector<32x128xf32>, vector<8x128xf32> -> vector<8x128xf32>
    %209 = arith.addf %207, %208 : vector<8x128xf32>
    %210 = arith.negf %209 : vector<8x128xf32>
    %211 = math.exp %210 : vector<8x128xf32>
    %cst_68 = arith.constant 1.000000e+00 : f32
    %212 = vector.broadcast %cst_68 : f32 to vector<8x128xf32>
    %213 = arith.addf %212, %211 : vector<8x128xf32>
    %214 = arith.divf %212, %213 : vector<8x128xf32>
    %215 = math.tanh %209 : vector<8x128xf32>
    %216 = vector.extract_strided_slice %214 {offsets = [0, 0], sizes = [8, 32], strides = [1, 1]} : vector<8x128xf32> to vector<8x32xf32>
    %217 = vector.extract_strided_slice %214 {offsets = [0, 32], sizes = [8, 32], strides = [1, 1]} : vector<8x128xf32> to vector<8x32xf32>
    %218 = vector.extract_strided_slice %215 {offsets = [0, 64], sizes = [8, 32], strides = [1, 1]} : vector<8x128xf32> to vector<8x32xf32>
    %219 = vector.extract_strided_slice %214 {offsets = [0, 96], sizes = [8, 32], strides = [1, 1]} : vector<8x128xf32> to vector<8x32xf32>
    %220 = arith.mulf %217, %203 : vector<8x32xf32>
    %221 = arith.mulf %216, %218 : vector<8x32xf32>
    %222 = arith.addf %220, %221 : vector<8x32xf32>
    %223 = math.tanh %222 : vector<8x32xf32>
    %224 = arith.mulf %219, %223 : vector<8x32xf32>
    %225 = arith.index_cast %205 : i32 to index
    %c0_69 = arith.constant 0 : index
    %226 = vector.load %arg7[%225, %c0_69] : memref<64x32xf32, #tpu.memory_space<vmem>>, vector<8x32xf32>
    tpu.vector_store %arg7[%225, %c0_69], %224 {strides = array<i32>} : memref<64x32xf32, #tpu.memory_space<vmem>>, vector<8x32xf32>,
    %c1_i32_70 = arith.constant 1 : i32
    %c8_i32_71 = arith.constant 8 : i32
    %227 = arith.muli %c1_i32_70, %c8_i32_71 : i32
    %228 = tpu.assume_multiple %227, 8 : i32
    %229 = arith.index_cast %228 : i32 to index
    %c0_72 = arith.constant 0 : index
    %230 = vector.load %arg8[%229, %c0_72] : memref<64x128xf32, #tpu.memory_space<vmem>>, vector<8x128xf32>
    %cst_73 = arith.constant dense<0.000000e+00> : vector<8x128xf32>
    %231 = tpu.matmul %224, %201, %cst_73 {dimension_numbers = #tpu.dot_dimension_numbers<[1], [0], [0], [1], [0, 0, 1, 1], [], []>} : vector<8x32xf32>, vector<32x128xf32>, vector<8x128xf32> -> vector<8x128xf32>
    %232 = arith.addf %230, %231 : vector<8x128xf32>
    %233 = arith.negf %232 : vector<8x128xf32>
    %234 = math.exp %233 : vector<8x128xf32>
    %cst_74 = arith.constant 1.000000e+00 : f32
    %235 = vector.broadcast %cst_74 : f32 to vector<8x128xf32>
    %236 = arith.addf %235, %234 : vector<8x128xf32>
    %237 = arith.divf %235, %236 : vector<8x128xf32>
    %238 = math.tanh %232 : vector<8x128xf32>
    %239 = vector.extract_strided_slice %237 {offsets = [0, 0], sizes = [8, 32], strides = [1, 1]} : vector<8x128xf32> to vector<8x32xf32>
    %240 = vector.extract_strided_slice %237 {offsets = [0, 32], sizes = [8, 32], strides = [1, 1]} : vector<8x128xf32> to vector<8x32xf32>
    %241 = vector.extract_strided_slice %238 {offsets = [0, 64], sizes = [8, 32], strides = [1, 1]} : vector<8x128xf32> to vector<8x32xf32>
    %242 = vector.extract_strided_slice %237 {offsets = [0, 96], sizes = [8, 32], strides = [1, 1]} : vector<8x128xf32> to vector<8x32xf32>
    %243 = arith.mulf %240, %222 : vector<8x32xf32>
    %244 = arith.mulf %239, %241 : vector<8x32xf32>
    %245 = arith.addf %243, %244 : vector<8x32xf32>
    %246 = math.tanh %245 : vector<8x32xf32>
    %247 = arith.mulf %242, %246 : vector<8x32xf32>
    %248 = arith.index_cast %228 : i32 to index
    %c0_75 = arith.constant 0 : index
    %249 = vector.load %arg7[%248, %c0_75] : memref<64x32xf32, #tpu.memory_space<vmem>>, vector<8x32xf32>
    tpu.vector_store %arg7[%248, %c0_75], %247 {strides = array<i32>} : memref<64x32xf32, #tpu.memory_space<vmem>>, vector<8x32xf32>,
    %c2_i32_76 = arith.constant 2 : i32
    %c8_i32_77 = arith.constant 8 : i32
    %250 = arith.muli %c2_i32_76, %c8_i32_77 : i32
    %251 = tpu.assume_multiple %250, 8 : i32
    %252 = arith.index_cast %251 : i32 to index
    %c0_78 = arith.constant 0 : index
    %253 = vector.load %arg8[%252, %c0_78] : memref<64x128xf32, #tpu.memory_space<vmem>>, vector<8x128xf32>
    %cst_79 = arith.constant dense<0.000000e+00> : vector<8x128xf32>
    %254 = tpu.matmul %247, %201, %cst_79 {dimension_numbers = #tpu.dot_dimension_numbers<[1], [0], [0], [1], [0, 0, 1, 1], [], []>} : vector<8x32xf32>, vector<32x128xf32>, vector<8x128xf32> -> vector<8x128xf32>
    %255 = arith.addf %253, %254 : vector<8x128xf32>
    %256 = arith.negf %255 : vector<8x128xf32>
    %257 = math.exp %256 : vector<8x128xf32>
    %cst_80 = arith.constant 1.000000e+00 : f32
    %258 = vector.broadcast %cst_80 : f32 to vector<8x128xf32>
    %259 = arith.addf %258, %257 : vector<8x128xf32>
    %260 = arith.divf %258, %259 : vector<8x128xf32>
    %261 = math.tanh %255 : vector<8x128xf32>
    %262 = vector.extract_strided_slice %260 {offsets = [0, 0], sizes = [8, 32], strides = [1, 1]} : vector<8x128xf32> to vector<8x32xf32>
    %263 = vector.extract_strided_slice %260 {offsets = [0, 32], sizes = [8, 32], strides = [1, 1]} : vector<8x128xf32> to vector<8x32xf32>
    %264 = vector.extract_strided_slice %261 {offsets = [0, 64], sizes = [8, 32], strides = [1, 1]} : vector<8x128xf32> to vector<8x32xf32>
    %265 = vector.extract_strided_slice %260 {offsets = [0, 96], sizes = [8, 32], strides = [1, 1]} : vector<8x128xf32> to vector<8x32xf32>
    %266 = arith.mulf %263, %245 : vector<8x32xf32>
    %267 = arith.mulf %262, %264 : vector<8x32xf32>
    %268 = arith.addf %266, %267 : vector<8x32xf32>
    %269 = math.tanh %268 : vector<8x32xf32>
    %270 = arith.mulf %265, %269 : vector<8x32xf32>
    %271 = arith.index_cast %251 : i32 to index
    %c0_81 = arith.constant 0 : index
    %272 = vector.load %arg7[%271, %c0_81] : memref<64x32xf32, #tpu.memory_space<vmem>>, vector<8x32xf32>
    tpu.vector_store %arg7[%271, %c0_81], %270 {strides = array<i32>} : memref<64x32xf32, #tpu.memory_space<vmem>>, vector<8x32xf32>,
    %c3_i32_82 = arith.constant 3 : i32
    %c8_i32_83 = arith.constant 8 : i32
    %273 = arith.muli %c3_i32_82, %c8_i32_83 : i32
    %274 = tpu.assume_multiple %273, 8 : i32
    %275 = arith.index_cast %274 : i32 to index
    %c0_84 = arith.constant 0 : index
    %276 = vector.load %arg8[%275, %c0_84] : memref<64x128xf32, #tpu.memory_space<vmem>>, vector<8x128xf32>
    %cst_85 = arith.constant dense<0.000000e+00> : vector<8x128xf32>
    %277 = tpu.matmul %270, %201, %cst_85 {dimension_numbers = #tpu.dot_dimension_numbers<[1], [0], [0], [1], [0, 0, 1, 1], [], []>} : vector<8x32xf32>, vector<32x128xf32>, vector<8x128xf32> -> vector<8x128xf32>
    %278 = arith.addf %276, %277 : vector<8x128xf32>
    %279 = arith.negf %278 : vector<8x128xf32>
    %280 = math.exp %279 : vector<8x128xf32>
    %cst_86 = arith.constant 1.000000e+00 : f32
    %281 = vector.broadcast %cst_86 : f32 to vector<8x128xf32>
    %282 = arith.addf %281, %280 : vector<8x128xf32>
    %283 = arith.divf %281, %282 : vector<8x128xf32>
    %284 = math.tanh %278 : vector<8x128xf32>
    %285 = vector.extract_strided_slice %283 {offsets = [0, 0], sizes = [8, 32], strides = [1, 1]} : vector<8x128xf32> to vector<8x32xf32>
    %286 = vector.extract_strided_slice %283 {offsets = [0, 32], sizes = [8, 32], strides = [1, 1]} : vector<8x128xf32> to vector<8x32xf32>
    %287 = vector.extract_strided_slice %284 {offsets = [0, 64], sizes = [8, 32], strides = [1, 1]} : vector<8x128xf32> to vector<8x32xf32>
    %288 = vector.extract_strided_slice %283 {offsets = [0, 96], sizes = [8, 32], strides = [1, 1]} : vector<8x128xf32> to vector<8x32xf32>
    %289 = arith.mulf %286, %268 : vector<8x32xf32>
    %290 = arith.mulf %285, %287 : vector<8x32xf32>
    %291 = arith.addf %289, %290 : vector<8x32xf32>
    %292 = math.tanh %291 : vector<8x32xf32>
    %293 = arith.mulf %288, %292 : vector<8x32xf32>
    %294 = arith.index_cast %274 : i32 to index
    %c0_87 = arith.constant 0 : index
    %295 = vector.load %arg7[%294, %c0_87] : memref<64x32xf32, #tpu.memory_space<vmem>>, vector<8x32xf32>
    tpu.vector_store %arg7[%294, %c0_87], %293 {strides = array<i32>} : memref<64x32xf32, #tpu.memory_space<vmem>>, vector<8x32xf32>,
    %c4_i32_88 = arith.constant 4 : i32
    %c8_i32_89 = arith.constant 8 : i32
    %296 = arith.muli %c4_i32_88, %c8_i32_89 : i32
    %297 = tpu.assume_multiple %296, 8 : i32
    %298 = arith.index_cast %297 : i32 to index
    %c0_90 = arith.constant 0 : index
    %299 = vector.load %arg8[%298, %c0_90] : memref<64x128xf32, #tpu.memory_space<vmem>>, vector<8x128xf32>
    %cst_91 = arith.constant dense<0.000000e+00> : vector<8x128xf32>
    %300 = tpu.matmul %293, %201, %cst_91 {dimension_numbers = #tpu.dot_dimension_numbers<[1], [0], [0], [1], [0, 0, 1, 1], [], []>} : vector<8x32xf32>, vector<32x128xf32>, vector<8x128xf32> -> vector<8x128xf32>
    %301 = arith.addf %299, %300 : vector<8x128xf32>
    %302 = arith.negf %301 : vector<8x128xf32>
    %303 = math.exp %302 : vector<8x128xf32>
    %cst_92 = arith.constant 1.000000e+00 : f32
    %304 = vector.broadcast %cst_92 : f32 to vector<8x128xf32>
    %305 = arith.addf %304, %303 : vector<8x128xf32>
    %306 = arith.divf %304, %305 : vector<8x128xf32>
    %307 = math.tanh %301 : vector<8x128xf32>
    %308 = vector.extract_strided_slice %306 {offsets = [0, 0], sizes = [8, 32], strides = [1, 1]} : vector<8x128xf32> to vector<8x32xf32>
    %309 = vector.extract_strided_slice %306 {offsets = [0, 32], sizes = [8, 32], strides = [1, 1]} : vector<8x128xf32> to vector<8x32xf32>
    %310 = vector.extract_strided_slice %307 {offsets = [0, 64], sizes = [8, 32], strides = [1, 1]} : vector<8x128xf32> to vector<8x32xf32>
    %311 = vector.extract_strided_slice %306 {offsets = [0, 96], sizes = [8, 32], strides = [1, 1]} : vector<8x128xf32> to vector<8x32xf32>
    %312 = arith.mulf %309, %291 : vector<8x32xf32>
    %313 = arith.mulf %308, %310 : vector<8x32xf32>
    %314 = arith.addf %312, %313 : vector<8x32xf32>
    %315 = math.tanh %314 : vector<8x32xf32>
    %316 = arith.mulf %311, %315 : vector<8x32xf32>
    %317 = arith.index_cast %297 : i32 to index
    %c0_93 = arith.constant 0 : index
    %318 = vector.load %arg7[%317, %c0_93] : memref<64x32xf32, #tpu.memory_space<vmem>>, vector<8x32xf32>
    tpu.vector_store %arg7[%317, %c0_93], %316 {strides = array<i32>} : memref<64x32xf32, #tpu.memory_space<vmem>>, vector<8x32xf32>,
    %c5_i32_94 = arith.constant 5 : i32
    %c8_i32_95 = arith.constant 8 : i32
    %319 = arith.muli %c5_i32_94, %c8_i32_95 : i32
    %320 = tpu.assume_multiple %319, 8 : i32
    %321 = arith.index_cast %320 : i32 to index
    %c0_96 = arith.constant 0 : index
    %322 = vector.load %arg8[%321, %c0_96] : memref<64x128xf32, #tpu.memory_space<vmem>>, vector<8x128xf32>
    %cst_97 = arith.constant dense<0.000000e+00> : vector<8x128xf32>
    %323 = tpu.matmul %316, %201, %cst_97 {dimension_numbers = #tpu.dot_dimension_numbers<[1], [0], [0], [1], [0, 0, 1, 1], [], []>} : vector<8x32xf32>, vector<32x128xf32>, vector<8x128xf32> -> vector<8x128xf32>
    %324 = arith.addf %322, %323 : vector<8x128xf32>
    %325 = arith.negf %324 : vector<8x128xf32>
    %326 = math.exp %325 : vector<8x128xf32>
    %cst_98 = arith.constant 1.000000e+00 : f32
    %327 = vector.broadcast %cst_98 : f32 to vector<8x128xf32>
    %328 = arith.addf %327, %326 : vector<8x128xf32>
    %329 = arith.divf %327, %328 : vector<8x128xf32>
    %330 = math.tanh %324 : vector<8x128xf32>
    %331 = vector.extract_strided_slice %329 {offsets = [0, 0], sizes = [8, 32], strides = [1, 1]} : vector<8x128xf32> to vector<8x32xf32>
    %332 = vector.extract_strided_slice %329 {offsets = [0, 32], sizes = [8, 32], strides = [1, 1]} : vector<8x128xf32> to vector<8x32xf32>
    %333 = vector.extract_strided_slice %330 {offsets = [0, 64], sizes = [8, 32], strides = [1, 1]} : vector<8x128xf32> to vector<8x32xf32>
    %334 = vector.extract_strided_slice %329 {offsets = [0, 96], sizes = [8, 32], strides = [1, 1]} : vector<8x128xf32> to vector<8x32xf32>
    %335 = arith.mulf %332, %314 : vector<8x32xf32>
    %336 = arith.mulf %331, %333 : vector<8x32xf32>
    %337 = arith.addf %335, %336 : vector<8x32xf32>
    %338 = math.tanh %337 : vector<8x32xf32>
    %339 = arith.mulf %334, %338 : vector<8x32xf32>
    %340 = arith.index_cast %320 : i32 to index
    %c0_99 = arith.constant 0 : index
    %341 = vector.load %arg7[%340, %c0_99] : memref<64x32xf32, #tpu.memory_space<vmem>>, vector<8x32xf32>
    tpu.vector_store %arg7[%340, %c0_99], %339 {strides = array<i32>} : memref<64x32xf32, #tpu.memory_space<vmem>>, vector<8x32xf32>,
    %c6_i32_100 = arith.constant 6 : i32
    %c8_i32_101 = arith.constant 8 : i32
    %342 = arith.muli %c6_i32_100, %c8_i32_101 : i32
    %343 = tpu.assume_multiple %342, 8 : i32
    %344 = arith.index_cast %343 : i32 to index
    %c0_102 = arith.constant 0 : index
    %345 = vector.load %arg8[%344, %c0_102] : memref<64x128xf32, #tpu.memory_space<vmem>>, vector<8x128xf32>
    %cst_103 = arith.constant dense<0.000000e+00> : vector<8x128xf32>
    %346 = tpu.matmul %339, %201, %cst_103 {dimension_numbers = #tpu.dot_dimension_numbers<[1], [0], [0], [1], [0, 0, 1, 1], [], []>} : vector<8x32xf32>, vector<32x128xf32>, vector<8x128xf32> -> vector<8x128xf32>
    %347 = arith.addf %345, %346 : vector<8x128xf32>
    %348 = arith.negf %347 : vector<8x128xf32>
    %349 = math.exp %348 : vector<8x128xf32>
    %cst_104 = arith.constant 1.000000e+00 : f32
    %350 = vector.broadcast %cst_104 : f32 to vector<8x128xf32>
    %351 = arith.addf %350, %349 : vector<8x128xf32>
    %352 = arith.divf %350, %351 : vector<8x128xf32>
    %353 = math.tanh %347 : vector<8x128xf32>
    %354 = vector.extract_strided_slice %352 {offsets = [0, 0], sizes = [8, 32], strides = [1, 1]} : vector<8x128xf32> to vector<8x32xf32>
    %355 = vector.extract_strided_slice %352 {offsets = [0, 32], sizes = [8, 32], strides = [1, 1]} : vector<8x128xf32> to vector<8x32xf32>
    %356 = vector.extract_strided_slice %353 {offsets = [0, 64], sizes = [8, 32], strides = [1, 1]} : vector<8x128xf32> to vector<8x32xf32>
    %357 = vector.extract_strided_slice %352 {offsets = [0, 96], sizes = [8, 32], strides = [1, 1]} : vector<8x128xf32> to vector<8x32xf32>
    %358 = arith.mulf %355, %337 : vector<8x32xf32>
    %359 = arith.mulf %354, %356 : vector<8x32xf32>
    %360 = arith.addf %358, %359 : vector<8x32xf32>
    %361 = math.tanh %360 : vector<8x32xf32>
    %362 = arith.mulf %357, %361 : vector<8x32xf32>
    %363 = arith.index_cast %343 : i32 to index
    %c0_105 = arith.constant 0 : index
    %364 = vector.load %arg7[%363, %c0_105] : memref<64x32xf32, #tpu.memory_space<vmem>>, vector<8x32xf32>
    tpu.vector_store %arg7[%363, %c0_105], %362 {strides = array<i32>} : memref<64x32xf32, #tpu.memory_space<vmem>>, vector<8x32xf32>,
    %c7_i32_106 = arith.constant 7 : i32
    %c8_i32_107 = arith.constant 8 : i32
    %365 = arith.muli %c7_i32_106, %c8_i32_107 : i32
    %366 = tpu.assume_multiple %365, 8 : i32
    %367 = arith.index_cast %366 : i32 to index
    %c0_108 = arith.constant 0 : index
    %368 = vector.load %arg8[%367, %c0_108] : memref<64x128xf32, #tpu.memory_space<vmem>>, vector<8x128xf32>
    %cst_109 = arith.constant dense<0.000000e+00> : vector<8x128xf32>
    %369 = tpu.matmul %362, %201, %cst_109 {dimension_numbers = #tpu.dot_dimension_numbers<[1], [0], [0], [1], [0, 0, 1, 1], [], []>} : vector<8x32xf32>, vector<32x128xf32>, vector<8x128xf32> -> vector<8x128xf32>
    %370 = arith.addf %368, %369 : vector<8x128xf32>
    %371 = arith.negf %370 : vector<8x128xf32>
    %372 = math.exp %371 : vector<8x128xf32>
    %cst_110 = arith.constant 1.000000e+00 : f32
    %373 = vector.broadcast %cst_110 : f32 to vector<8x128xf32>
    %374 = arith.addf %373, %372 : vector<8x128xf32>
    %375 = arith.divf %373, %374 : vector<8x128xf32>
    %376 = math.tanh %370 : vector<8x128xf32>
    %377 = vector.extract_strided_slice %375 {offsets = [0, 0], sizes = [8, 32], strides = [1, 1]} : vector<8x128xf32> to vector<8x32xf32>
    %378 = vector.extract_strided_slice %375 {offsets = [0, 32], sizes = [8, 32], strides = [1, 1]} : vector<8x128xf32> to vector<8x32xf32>
    %379 = vector.extract_strided_slice %376 {offsets = [0, 64], sizes = [8, 32], strides = [1, 1]} : vector<8x128xf32> to vector<8x32xf32>
    %380 = vector.extract_strided_slice %375 {offsets = [0, 96], sizes = [8, 32], strides = [1, 1]} : vector<8x128xf32> to vector<8x32xf32>
    %381 = arith.mulf %378, %360 : vector<8x32xf32>
    %382 = arith.mulf %377, %379 : vector<8x32xf32>
    %383 = arith.addf %381, %382 : vector<8x32xf32>
    %384 = math.tanh %383 : vector<8x32xf32>
    %385 = arith.mulf %380, %384 : vector<8x32xf32>
    %386 = arith.index_cast %366 : i32 to index
    %c0_111 = arith.constant 0 : index
    %387 = vector.load %arg7[%386, %c0_111] : memref<64x32xf32, #tpu.memory_space<vmem>>, vector<8x32xf32>
    tpu.vector_store %arg7[%386, %c0_111], %385 {strides = array<i32>} : memref<64x32xf32, #tpu.memory_space<vmem>>, vector<8x32xf32>,
    %c8_i32_112 = arith.constant 8 : i32
    return
  }
}

</mosaic_0001>

<llo_original>
// kernel: tpu_custom_call.1
$region0: #{tpu_custom_call.1}
  #allocation0 [shape = 'u32[]', space=smem, size = 0x4, offset = 0x4, fixed_abs, tag = 'smem constant byte address 0x4 - core index']
  #allocation1 [shape = 'u32[144,128]{1,0:T(1,128)}', space=vmem, size = 0x12000, scoped, tag = 'internal scratch']
  #allocation2 [shape = 'f32[64,128]{1,0:T(8,128)}', space=vmem, size = 0x8000, scoped, tag = 'scratch operand']
  #allocation3 [shape = 'f32[64,32]{1,0:T(8,128)}', space=vmem, size = 0x8000, scoped, tag = 'scratch operand']
  %s0 = inlined_call_operand.vmem [shape: f32[64,8], index: 0, kind: input, shape index: {}]
  %s1 = inlined_call_operand.vmem [shape: f32[8,128], index: 1, kind: input, shape index: {}]
  %s2 = inlined_call_operand.vmem [shape: f32[32,128], index: 2, kind: input, shape index: {}]
  %s3 = inlined_call_operand.vmem [shape: f32[1,128], index: 3, kind: input, shape index: {}]
  %s4 = inlined_call_operand.vmem [shape: f32[32,128], index: 4, kind: input, shape index: {}]
  %s5 = inlined_call_operand.hbm [shape: f32[32,128], index: 5, kind: input, shape index: {}]
  %s6 = inlined_call_operand.vmem [shape: f32[1,128], index: 6, kind: input, shape index: {}]
  %s7 = inlined_call_operand.vmem [shape: f32[64,32], index: 7, kind: output, shape index: {}]
  %s8 = sld [smem:[#allocation0]]
  $region42: #{tpu_custom_call.1} parent=0
    _
  %s10 = ssub.s32 1, %s8
  %s11 = scalar_select 0, %s10, %s8
  $region1: #{tpu_custom_call.1} parent=0
    #allocation4 [shape = 'u8[16384]{0}', space=vmem, size = 0x4000, scoped, tag = 'input window, operand 5, single buffered']
    #allocation5 [shape = 's32[1]{0}', space=sflag, size = 0x4, scoped, tag = 'scoped memory for tpu_custom_call.1']
    %12 = vsyncpa [#allocation5], 0
    // Predicated region
    $region2: #{tpu_custom_call.1} parent=1 // pred_check
      _
    $region3: #{tpu_custom_call.1} parent=1 // pred_check_branch
      %14 = sbr.rel (0) target = $region5
    $region4: #{tpu_custom_call.1} parent=1 // pred_region
      _
    $region5: #{tpu_custom_call.1} parent=1 // pred_fallthru
      _
    // Predicated region
    $region6: #{tpu_custom_call.1} parent=1 // pred_check
      _
    $region7: #{tpu_custom_call.1} parent=1 // pred_check_branch
      %16 = sbr.rel (0) target = $region9
    $region8: #{tpu_custom_call.1} parent=1 // pred_region
      _
    $region9: #{tpu_custom_call.1} parent=1 // pred_fallthru
      _
    // Predicated region
    $region10: #{tpu_custom_call.1} parent=1 // pred_check
      _
    $region11: #{tpu_custom_call.1} parent=1 // pred_check_branch
      %18 = sbr.rel (0) target = $region13
    $region12: #{tpu_custom_call.1} parent=1 // pred_region
      _
    $region13: #{tpu_custom_call.1} parent=1 // pred_fallthru
      _
    // Predicated region
    $region14: #{tpu_custom_call.1} parent=1 // pred_check
      _
    $region15: #{tpu_custom_call.1} parent=1 // pred_check_branch
      %20 = sbr.rel (0) target = $region17
    $region16: #{tpu_custom_call.1} parent=1 // pred_region
      _
    $region17: #{tpu_custom_call.1} parent=1 // pred_fallthru
      _
    // Predicated region
    $region18: #{tpu_custom_call.1} parent=1 // pred_check
      _
    $region19: #{tpu_custom_call.1} parent=1 // pred_check_branch
      %22 = sbr.rel (0) target = $region21
    $region20: #{tpu_custom_call.1} parent=1 // pred_region
      _
    $region21: #{tpu_custom_call.1} parent=1 // pred_fallthru
      _
    // Predicated region
    $region22: #{tpu_custom_call.1} parent=1 // pred_check
      _
    $region23: #{tpu_custom_call.1} parent=1 // pred_check_branch
      %24 = sbr.rel (0) target = $region25
    $region24: #{tpu_custom_call.1} parent=1 // pred_region
      %s26 = ssub.s32 512, 512
      %27 = vsyncadd [#allocation5], %s26
      %s28 = sshll.u32 [#allocation4], 4
      %s29 = int_to_ptr.vmem [resolvable:$true] %s28
      %34 = dma.hbm_to_vmem [thread:$0]  %s5, 512, %s29, [#allocation5], 128, 128, 8
    $region25: #{tpu_custom_call.1} parent=1 // pred_fallthru
      _
    // Predicated region
    $region26: #{tpu_custom_call.1} parent=1 // pred_check
      _
    $region27: #{tpu_custom_call.1} parent=1 // pred_check_branch
      %36 = sbr.rel (0) target = $region29
    $region28: #{tpu_custom_call.1} parent=1 // pred_region
      _
    $region29: #{tpu_custom_call.1} parent=1 // pred_fallthru
      _
    // Predicated region
    $region30: #{tpu_custom_call.1} parent=1 // pred_check
      _
    $region31: #{tpu_custom_call.1} parent=1 // pred_check_branch
      %38 = sbr.rel (0) target = $region33
    $region32: #{tpu_custom_call.1} parent=1 // pred_region
      %39 = dma.done [#allocation5], 512
    $region33: #{tpu_custom_call.1} parent=1 // pred_fallthru
      _
    %v40 = vld [vmem:[%s0] sm:$0xff]
    %v41 = vld [vmem:[%s0 + $0x8] sm:$0xff]
    %v42 = vld [vmem:[%s0 + $0x10] sm:$0xff]
    %v43 = vld [vmem:[%s0 + $0x18] sm:$0xff]
    %v44 = vld [vmem:[%s0 + $0x20] sm:$0xff]
    %v45 = vld [vmem:[%s0 + $0x28] sm:$0xff]
    %v46 = vld [vmem:[%s0 + $0x30] sm:$0xff]
    %v47 = vld [vmem:[%s0 + $0x38] sm:$0xff]
    %v48 = vld [vmem:[%s1] sm:$0xff]
    %v49 = vld [vmem:[%s3] sm:$0x1]
    %v51 = vlaneseq
    %v52 = vshrl.u32 %v51, 7
    %v53 = vsub.s32 0, %v52
    %v54 = vrot.slane %v49, %v53
    %vm56 = vcmask 64512
    %v58 = vsel %vm56, %v40, 0
    %v61 = vsel %vm56, %v41, 0
    %v64 = vsel %vm56, %v42, 0
    %v67 = vsel %vm56, %v43, 0
    %v70 = vsel %vm56, %v44, 0
    %v73 = vsel %vm56, %v45, 0
    %v76 = vsel %vm56, %v46, 0
    %v79 = vsel %vm56, %v47, 0
    %81 = vmatprep.subr.mxu0 0.0
    %82 = vmatpush1.msra.mxu0 0.0
    %83 = vmatprep.subr.mxu0 0.0
    %84 = vmatpush1.msra.mxu0 0.0
    %85 = vmatprep.subr.mxu0 0.0
    %86 = vmatpush1.msra.mxu0 0.0
    %87 = vmatprep.subr.mxu0 0.0
    %88 = vmatpush1.msra.mxu0 0.0
    %89 = vmatprep.subr.mxu0 0.0
    %90 = vmatpush1.msra.mxu0 0.0
    %91 = vmatprep.subr.mxu0 0.0
    %92 = vmatpush1.msra.mxu0 0.0
    %93 = vmatprep.subr.mxu0 0.0
    %94 = vmatpush1.msra.mxu0 0.0
    %95 = vmatprep.subr.mxu0 0.0
    %96 = vmatpush1.msra.mxu0 0.0
    %97 = vmatprep.subr.mxu0 0.0
    %98 = vmatpush1.msra.mxu0 0.0
    %99 = vmatprep.subr.mxu0 0.0
    %100 = vmatpush1.msra.mxu0 0.0
    %101 = vmatprep.subr.mxu0 0.0
    %102 = vmatpush1.msra.mxu0 0.0
    %103 = vmatprep.subr.mxu0 0.0
    %104 = vmatpush1.msra.mxu0 0.0
    %105 = vmatprep.subr.mxu0 0.0
    %106 = vmatpush1.msra.mxu0 0.0
    %107 = vmatprep.subr.mxu0 0.0
    %108 = vmatpush1.msra.mxu0 0.0
    %109 = vmatprep.subr.mxu0 0.0
    %110 = vmatpush1.msra.mxu0 0.0
    %111 = vmatprep.subr.mxu0 0.0
    %112 = vmatpush1.msra.mxu0 %v48
    %113 = vmatprep.subr.mxu0 0.0
    %114 = vmatpush2.msra.mxu0 0.0
    %115 = vmatprep.subr.mxu0 0.0
    %116 = vmatpush2.msra.mxu0 0.0
    %117 = vmatprep.subr.mxu0 0.0
    %118 = vmatpush2.msra.mxu0 0.0
    %119 = vmatprep.subr.mxu0 0.0
    %120 = vmatpush2.msra.mxu0 0.0
    %121 = vmatprep.subr.mxu0 0.0
    %122 = vmatpush2.msra.mxu0 0.0
    %123 = vmatprep.subr.mxu0 0.0
    %124 = vmatpush2.msra.mxu0 0.0
    %125 = vmatprep.subr.mxu0 0.0
    %126 = vmatpush2.msra.mxu0 0.0
    %127 = vmatprep.subr.mxu0 0.0
    %128 = vmatpush2.msra.mxu0 0.0
    %129 = vmatprep.subr.mxu0 0.0
    %130 = vmatpush2.msra.mxu0 0.0
    %131 = vmatprep.subr.mxu0 0.0
    %132 = vmatpush2.msra.mxu0 0.0
    %133 = vmatprep.subr.mxu0 0.0
    %134 = vmatpush2.msra.mxu0 0.0
    %135 = vmatprep.subr.mxu0 0.0
    %136 = vmatpush2.msra.mxu0 0.0
    %137 = vmatprep.subr.mxu0 0.0
    %138 = vmatpush2.msra.mxu0 0.0
    %139 = vmatprep.subr.mxu0 0.0
    %140 = vmatpush2.msra.mxu0 0.0
    %141 = vmatprep.subr.mxu0 0.0
    %142 = vmatpush2.msra.mxu0 0.0
    %143 = vmatprep.subr.mxu0 0.0
    %144 = vmatpush2.msra.mxu0 0.0
    %145 = vmatprep.mubr.f32.mxu0 0.0
    %146 = vmatmul.mubr.f32.gmra.mxu0 %v58
    %v147 = vpop.f32.mrf.mxu0
    %v148 = vadd.f32 %v54, %v147
    %v149 = vpop.f32.mrf.mxu0
    %150 = vmatprep.mubr.f32.mxu0 0.0
    %151 = vmatmul.mubr.f32.gmra.mxu0 %v61
    %v152 = vpop.f32.mrf.mxu0
    %v153 = vadd.f32 %v54, %v152
    %v154 = vpop.f32.mrf.mxu0
    %155 = vmatprep.mubr.f32.mxu0 0.0
    %156 = vmatmul.mubr.f32.gmra.mxu0 %v64
    %v157 = vpop.f32.mrf.mxu0
    %v158 = vadd.f32 %v54, %v157
    %v159 = vpop.f32.mrf.mxu0
    %160 = vmatprep.mubr.f32.mxu0 0.0
    %161 = vmatmul.mubr.f32.gmra.mxu0 %v67
    %v162 = vpop.f32.mrf.mxu0
    %v163 = vadd.f32 %v54, %v162
    %v164 = vpop.f32.mrf.mxu0
    %165 = vmatprep.mubr.f32.mxu0 0.0
    %166 = vmatmul.mubr.f32.gmra.mxu0 %v70
    %v167 = vpop.f32.mrf.mxu0
    %v168 = vadd.f32 %v54, %v167
    %v169 = vpop.f32.mrf.mxu0
    %170 = vmatprep.mubr.f32.mxu0 0.0
    %171 = vmatmul.mubr.f32.gmra.mxu0 %v73
    %v172 = vpop.f32.mrf.mxu0
    %v173 = vadd.f32 %v54, %v172
    %v174 = vpop.f32.mrf.mxu0
    %175 = vmatprep.mubr.f32.mxu0 0.0
    %176 = vmatmul.mubr.f32.gmra.mxu0 %v76
    %v177 = vpop.f32.mrf.mxu0
    %v178 = vadd.f32 %v54, %v177
    %v179 = vpop.f32.mrf.mxu0
    %180 = vmatprep.mubr.f32.mxu0 0.0
    %181 = vmatmul.mubr.f32.gmra.mxu0 %v79
    %v182 = vpop.f32.mrf.mxu0
    %v183 = vadd.f32 %v54, %v182
    %v184 = vpop.f32.mrf.mxu0
    %185 = vdwg.mxu0
    %186 = vst [vmem:[#allocation2] sm:$0xff] %v148
    %187 = vst [vmem:[#allocation2 + $0x8] sm:$0xff] %v153
    %188 = vst [vmem:[#allocation2 + $0x10] sm:$0xff] %v158
    %189 = vst [vmem:[#allocation2 + $0x18] sm:$0xff] %v163
    %190 = vst [vmem:[#allocation2 + $0x20] sm:$0xff] %v168
    %191 = vst [vmem:[#allocation2 + $0x28] sm:$0xff] %v173
    %192 = vst [vmem:[#allocation2 + $0x30] sm:$0xff] %v178
    %193 = vst [vmem:[#allocation2 + $0x38] sm:$0xff] %v183
    %v194 = vld [vmem:[%s2] sm:$0xff]
    %v195 = vld [vmem:[%s2 + $0x8] sm:$0xff]
    %v196 = vld [vmem:[%s2 + $0x10] sm:$0xff]
    %v197 = vld [vmem:[%s2 + $0x18] sm:$0xff]
    %v198 = vld [vmem:[#allocation2] sm:$0xff]
    %vm199 = vcmask 261120
    %v201 = vsel %vm199, 0.0, 0
    %203 = vmatprep.subr.mxu0 0.0
    %204 = vmatpush1.msra.mxu0 0.0
    %205 = vmatprep.subr.mxu0 0.0
    %206 = vmatpush1.msra.mxu0 0.0
    %207 = vmatprep.subr.mxu0 0.0
    %208 = vmatpush1.msra.mxu0 0.0
    %209 = vmatprep.subr.mxu0 0.0
    %210 = vmatpush1.msra.mxu0 0.0
    %211 = vmatprep.subr.mxu0 0.0
    %212 = vmatpush1.msra.mxu0 0.0
    %213 = vmatprep.subr.mxu0 0.0
    %214 = vmatpush1.msra.mxu0 0.0
    %215 = vmatprep.subr.mxu0 0.0
    %216 = vmatpush1.msra.mxu0 0.0
    %217 = vmatprep.subr.mxu0 0.0
    %218 = vmatpush1.msra.mxu0 0.0
    %219 = vmatprep.subr.mxu0 0.0
    %220 = vmatpush1.msra.mxu0 0.0
    %221 = vmatprep.subr.mxu0 0.0
    %222 = vmatpush1.msra.mxu0 0.0
    %223 = vmatprep.subr.mxu0 0.0
    %224 = vmatpush1.msra.mxu0 0.0
    %225 = vmatprep.subr.mxu0 0.0
    %226 = vmatpush1.msra.mxu0 0.0
    %227 = vmatprep.subr.mxu0 0.0
    %228 = vmatpush1.msra.mxu0 %v197
    %229 = vmatprep.subr.mxu0 0.0
    %230 = vmatpush1.msra.mxu0 %v196
    %231 = vmatprep.subr.mxu0 0.0
    %232 = vmatpush1.msra.mxu0 %v195
    %233 = vmatprep.subr.mxu0 0.0
    %234 = vmatpush1.msra.mxu0 %v194
    %235 = vmatprep.subr.mxu0 0.0
    %236 = vmatpush2.msra.mxu0 0.0
    %237 = vmatprep.subr.mxu0 0.0
    %238 = vmatpush2.msra.mxu0 0.0
    %239 = vmatprep.subr.mxu0 0.0
    %240 = vmatpush2.msra.mxu0 0.0
    %241 = vmatprep.subr.mxu0 0.0
    %242 = vmatpush2.msra.mxu0 0.0
    %243 = vmatprep.subr.mxu0 0.0
    %244 = vmatpush2.msra.mxu0 0.0
    %245 = vmatprep.subr.mxu0 0.0
    %246 = vmatpush2.msra.mxu0 0.0
    %247 = vmatprep.subr.mxu0 0.0
    %248 = vmatpush2.msra.mxu0 0.0
    %249 = vmatprep.subr.mxu0 0.0
    %250 = vmatpush2.msra.mxu0 0.0
    %251 = vmatprep.subr.mxu0 0.0
    %252 = vmatpush2.msra.mxu0 0.0
    %253 = vmatprep.subr.mxu0 0.0
    %254 = vmatpush2.msra.mxu0 0.0
    %255 = vmatprep.subr.mxu0 0.0
    %256 = vmatpush2.msra.mxu0 0.0
    %257 = vmatprep.subr.mxu0 0.0
    %258 = vmatpush2.msra.mxu0 0.0
    %259 = vmatprep.subr.mxu0 0.0
    %260 = vmatpush2.msra.mxu0 0.0
    %261 = vmatprep.subr.mxu0 0.0
    %262 = vmatpush2.msra.mxu0 0.0
    %263 = vmatprep.subr.mxu0 0.0
    %264 = vmatpush2.msra.mxu0 0.0
    %265 = vmatprep.subr.mxu0 0.0
    %266 = vmatpush2.msra.mxu0 0.0
    %267 = vmatprep.mubr.f32.mxu0 0.0
    %268 = vmatmul.mubr.f32.gmra.mxu0 %v201
    %v269 = vpop.f32.mrf.mxu0
    %v270 = vadd.f32 0.0, %v269
    %v271 = vpop.f32.mrf.mxu0
    %272 = vdwg.mxu0
    %v273 = vadd.f32 %v198, %v270
    %v274 = vxor.u32 %v273, 2147483648
    %v275 = vmul.f32 %v274, 1.442695
    %v276 = vpow.pop %v275
    %v277 = vadd.f32 %v276, 1.0
    %v278 = vrcp.pop %v277
    %v279 = vmul.f32 1.0, %v278
    %v280 = vtanh.pop %v273
    %v281 = vmul.f32 %v279, 0.0
    %283 = vrot.lane.b32.xlu0 %v280, 64
    %v284 = vpop.permute.xlu0 %283
    %v286 = vmul.f32 %v279, %v284
    %288 = vrot.lane.b32.xlu0 %v286, 32
    %v289 = vpop.permute.xlu0 %288
    %v291 = vadd.f32 %v281, %v289
    %v292 = vtanh.pop %v291
    %294 = vrot.lane.b32.xlu0 %v292, 64
    %v295 = vpop.permute.xlu0 %294
    %v297 = vmul.f32 %v279, %v295
    %299 = vrot.lane.b32.xlu0 %v297, 32
    %v300 = vpop.permute.xlu0 %299
    %302 = vst.msk [vmem:[#allocation3] sm:$0xff] %vm199, %v300
    %s303 = scalar_lea.vmem [#allocation2], 8
    %v304 = vld [vmem:[%s303] sm:$0xff]
    %v305 = vsel %vm199, %v300, 0
    %307 = vmatprep.subr.mxu0 0.0
    %308 = vmatpush1.msra.mxu0 0.0
    %309 = vmatprep.subr.mxu0 0.0
    %310 = vmatpush1.msra.mxu0 0.0
    %311 = vmatprep.subr.mxu0 0.0
    %312 = vmatpush1.msra.mxu0 0.0
    %313 = vmatprep.subr.mxu0 0.0
    %314 = vmatpush1.msra.mxu0 0.0
    %315 = vmatprep.subr.mxu0 0.0
    %316 = vmatpush1.msra.mxu0 0.0
    %317 = vmatprep.subr.mxu0 0.0
    %318 = vmatpush1.msra.mxu0 0.0
    %319 = vmatprep.subr.mxu0 0.0
    %320 = vmatpush1.msra.mxu0 0.0
    %321 = vmatprep.subr.mxu0 0.0
    %322 = vmatpush1.msra.mxu0 0.0
    %323 = vmatprep.subr.mxu0 0.0
    %324 = vmatpush1.msra.mxu0 0.0
    %325 = vmatprep.subr.mxu0 0.0
    %326 = vmatpush1.msra.mxu0 0.0
    %327 = vmatprep.subr.mxu0 0.0
    %328 = vmatpush1.msra.mxu0 0.0
    %329 = vmatprep.subr.mxu0 0.0
    %330 = vmatpush1.msra.mxu0 0.0
    %331 = vmatprep.subr.mxu0 0.0
    %332 = vmatpush1.msra.mxu0 %v197
    %333 = vmatprep.subr.mxu0 0.0
    %334 = vmatpush1.msra.mxu0 %v196
    %335 = vmatprep.subr.mxu0 0.0
    %336 = vmatpush1.msra.mxu0 %v195
    %337 = vmatprep.subr.mxu0 0.0
    %338 = vmatpush1.msra.mxu0 %v194
    %339 = vmatprep.subr.mxu0 0.0
    %340 = vmatpush2.msra.mxu0 0.0
    %341 = vmatprep.subr.mxu0 0.0
    %342 = vmatpush2.msra.mxu0 0.0
    %343 = vmatprep.subr.mxu0 0.0
    %344 = vmatpush2.msra.mxu0 0.0
    %345 = vmatprep.subr.mxu0 0.0
    %346 = vmatpush2.msra.mxu0 0.0
    %347 = vmatprep.subr.mxu0 0.0
    %348 = vmatpush2.msra.mxu0 0.0
    %349 = vmatprep.subr.mxu0 0.0
    %350 = vmatpush2.msra.mxu0 0.0
    %351 = vmatprep.subr.mxu0 0.0
    %352 = vmatpush2.msra.mxu0 0.0
    %353 = vmatprep.subr.mxu0 0.0
    %354 = vmatpush2.msra.mxu0 0.0
    %355 = vmatprep.subr.mxu0 0.0
    %356 = vmatpush2.msra.mxu0 0.0
    %357 = vmatprep.subr.mxu0 0.0
    %358 = vmatpush2.msra.mxu0 0.0
    %359 = vmatprep.subr.mxu0 0.0
    %360 = vmatpush2.msra.mxu0 0.0
    %361 = vmatprep.subr.mxu0 0.0
    %362 = vmatpush2.msra.mxu0 0.0
    %363 = vmatprep.subr.mxu0 0.0
    %364 = vmatpush2.msra.mxu0 0.0
    %365 = vmatprep.subr.mxu0 0.0
    %366 = vmatpush2.msra.mxu0 0.0
    %367 = vmatprep.subr.mxu0 0.0
    %368 = vmatpush2.msra.mxu0 0.0
    %369 = vmatprep.subr.mxu0 0.0
    %370 = vmatpush2.msra.mxu0 0.0
    %371 = vmatprep.mubr.f32.mxu0 0.0
    %372 = vmatmul.mubr.f32.gmra.mxu0 %v305
    %v373 = vpop.f32.mrf.mxu0
    %v374 = vadd.f32 0.0, %v373
    %v375 = vpop.f32.mrf.mxu0
    %376 = vdwg.mxu0
    %v377 = vadd.f32 %v304, %v374
    %v378 = vxor.u32 %v377, 2147483648
    %v379 = vmul.f32 %v378, 1.442695
    %v380 = vpow.pop %v379
    %v381 = vadd.f32 %v380, 1.0
    %v382 = vrcp.pop %v381
    %v383 = vmul.f32 1.0, %v382
    %v384 = vtanh.pop %v377
    %v385 = vmul.f32 %v383, %v291
    %387 = vrot.lane.b32.xlu0 %v384, 64
    %v388 = vpop.permute.xlu0 %387
    %v390 = vmul.f32 %v383, %v388
    %392 = vrot.lane.b32.xlu0 %v390, 32
    %v393 = vpop.permute.xlu0 %392
    %v395 = vadd.f32 %v385, %v393
    %v396 = vtanh.pop %v395
    %398 = vrot.lane.b32.xlu0 %v396, 64
    %v399 = vpop.permute.xlu0 %398
    %v401 = vmul.f32 %v383, %v399
    %403 = vrot.lane.b32.xlu0 %v401, 32
    %v404 = vpop.permute.xlu0 %403
    %s406 = scalar_lea.vmem [#allocation3], 8
    %407 = vst.msk [vmem:[%s406] sm:$0xff] %vm199, %v404
    %s408 = scalar_lea.vmem [#allocation2], 16
    %v409 = vld [vmem:[%s408] sm:$0xff]
    %v410 = vsel %vm199, %v404, 0
    %412 = vmatprep.subr.mxu0 0.0
    %413 = vmatpush1.msra.mxu0 0.0
    %414 = vmatprep.subr.mxu0 0.0
    %415 = vmatpush1.msra.mxu0 0.0
    %416 = vmatprep.subr.mxu0 0.0
    %417 = vmatpush1.msra.mxu0 0.0
    %418 = vmatprep.subr.mxu0 0.0
    %419 = vmatpush1.msra.mxu0 0.0
    %420 = vmatprep.subr.mxu0 0.0
    %421 = vmatpush1.msra.mxu0 0.0
    %422 = vmatprep.subr.mxu0 0.0
    %423 = vmatpush1.msra.mxu0 0.0
    %424 = vmatprep.subr.mxu0 0.0
    %425 = vmatpush1.msra.mxu0 0.0
    %426 = vmatprep.subr.mxu0 0.0
    %427 = vmatpush1.msra.mxu0 0.0
    %428 = vmatprep.subr.mxu0 0.0
    %429 = vmatpush1.msra.mxu0 0.0
    %430 = vmatprep.subr.mxu0 0.0
    %431 = vmatpush1.msra.mxu0 0.0
    %432 = vmatprep.subr.mxu0 0.0
    %433 = vmatpush1.msra.mxu0 0.0
    %434 = vmatprep.subr.mxu0 0.0
    %435 = vmatpush1.msra.mxu0 0.0
    %436 = vmatprep.subr.mxu0 0.0
    %437 = vmatpush1.msra.mxu0 %v197
    %438 = vmatprep.subr.mxu0 0.0
    %439 = vmatpush1.msra.mxu0 %v196
    %440 = vmatprep.subr.mxu0 0.0
    %441 = vmatpush1.msra.mxu0 %v195
    %442 = vmatprep.subr.mxu0 0.0
    %443 = vmatpush1.msra.mxu0 %v194
    %444 = vmatprep.subr.mxu0 0.0
    %445 = vmatpush2.msra.mxu0 0.0
    %446 = vmatprep.subr.mxu0 0.0
    %447 = vmatpush2.msra.mxu0 0.0
    %448 = vmatprep.subr.mxu0 0.0
    %449 = vmatpush2.msra.mxu0 0.0
    %450 = vmatprep.subr.mxu0 0.0
    %451 = vmatpush2.msra.mxu0 0.0
    %452 = vmatprep.subr.mxu0 0.0
    %453 = vmatpush2.msra.mxu0 0.0
    %454 = vmatprep.subr.mxu0 0.0
    %455 = vmatpush2.msra.mxu0 0.0
    %456 = vmatprep.subr.mxu0 0.0
    %457 = vmatpush2.msra.mxu0 0.0
    %458 = vmatprep.subr.mxu0 0.0
    %459 = vmatpush2.msra.mxu0 0.0
    %460 = vmatprep.subr.mxu0 0.0
    %461 = vmatpush2.msra.mxu0 0.0
    %462 = vmatprep.subr.mxu0 0.0
    %463 = vmatpush2.msra.mxu0 0.0
    %464 = vmatprep.subr.mxu0 0.0
    %465 = vmatpush2.msra.mxu0 0.0
    %466 = vmatprep.subr.mxu0 0.0
    %467 = vmatpush2.msra.mxu0 0.0
    %468 = vmatprep.subr.mxu0 0.0
    %469 = vmatpush2.msra.mxu0 0.0
    %470 = vmatprep.subr.mxu0 0.0
    %471 = vmatpush2.msra.mxu0 0.0
    %472 = vmatprep.subr.mxu0 0.0
    %473 = vmatpush2.msra.mxu0 0.0
    %474 = vmatprep.subr.mxu0 0.0
    %475 = vmatpush2.msra.mxu0 0.0
    %476 = vmatprep.mubr.f32.mxu0 0.0
    %477 = vmatmul.mubr.f32.gmra.mxu0 %v410
    %v478 = vpop.f32.mrf.mxu0
    %v479 = vadd.f32 0.0, %v478
    %v480 = vpop.f32.mrf.mxu0
    %481 = vdwg.mxu0
    %v482 = vadd.f32 %v409, %v479
    %v483 = vxor.u32 %v482, 2147483648
    %v484 = vmul.f32 %v483, 1.442695
    %v485 = vpow.pop %v484
    %v486 = vadd.f32 %v485, 1.0
    %v487 = vrcp.pop %v486
    %v488 = vmul.f32 1.0, %v487
    %v489 = vtanh.pop %v482
    %v490 = vmul.f32 %v488, %v395
    %492 = vrot.lane.b32.xlu0 %v489, 64
    %v493 = vpop.permute.xlu0 %492
    %v495 = vmul.f32 %v488, %v493
    %497 = vrot.lane.b32.xlu0 %v495, 32
    %v498 = vpop.permute.xlu0 %497
    %v500 = vadd.f32 %v490, %v498
    %v501 = vtanh.pop %v500
    %503 = vrot.lane.b32.xlu0 %v501, 64
    %v504 = vpop.permute.xlu0 %503
    %v506 = vmul.f32 %v488, %v504
    %508 = vrot.lane.b32.xlu0 %v506, 32
    %v509 = vpop.permute.xlu0 %508
    %s511 = scalar_lea.vmem [#allocation3], 16
    %512 = vst.msk [vmem:[%s511] sm:$0xff] %vm199, %v509
    %s513 = scalar_lea.vmem [#allocation2], 24
    %v514 = vld [vmem:[%s513] sm:$0xff]
    %v515 = vsel %vm199, %v509, 0
    %517 = vmatprep.subr.mxu0 0.0
    %518 = vmatpush1.msra.mxu0 0.0
    %519 = vmatprep.subr.mxu0 0.0
    %520 = vmatpush1.msra.mxu0 0.0
    %521 = vmatprep.subr.mxu0 0.0
    %522 = vmatpush1.msra.mxu0 0.0
    %523 = vmatprep.subr.mxu0 0.0
    %524 = vmatpush1.msra.mxu0 0.0
    %525 = vmatprep.subr.mxu0 0.0
    %526 = vmatpush1.msra.mxu0 0.0
    %527 = vmatprep.subr.mxu0 0.0
    %528 = vmatpush1.msra.mxu0 0.0
    %529 = vmatprep.subr.mxu0 0.0
    %530 = vmatpush1.msra.mxu0 0.0
    %531 = vmatprep.subr.mxu0 0.0
    %532 = vmatpush1.msra.mxu0 0.0
    %533 = vmatprep.subr.mxu0 0.0
    %534 = vmatpush1.msra.mxu0 0.0
    %535 = vmatprep.subr.mxu0 0.0
    %536 = vmatpush1.msra.mxu0 0.0
    %537 = vmatprep.subr.mxu0 0.0
    %538 = vmatpush1.msra.mxu0 0.0
    %539 = vmatprep.subr.mxu0 0.0
    %540 = vmatpush1.msra.mxu0 0.0
    %541 = vmatprep.subr.mxu0 0.0
    %542 = vmatpush1.msra.mxu0 %v197
    %543 = vmatprep.subr.mxu0 0.0
    %544 = vmatpush1.msra.mxu0 %v196
    %545 = vmatprep.subr.mxu0 0.0
    %546 = vmatpush1.msra.mxu0 %v195
    %547 = vmatprep.subr.mxu0 0.0
    %548 = vmatpush1.msra.mxu0 %v194
    %549 = vmatprep.subr.mxu0 0.0
    %550 = vmatpush2.msra.mxu0 0.0
    %551 = vmatprep.subr.mxu0 0.0
    %552 = vmatpush2.msra.mxu0 0.0
    %553 = vmatprep.subr.mxu0 0.0
    %554 = vmatpush2.msra.mxu0 0.0
    %555 = vmatprep.subr.mxu0 0.0
    %556 = vmatpush2.msra.mxu0 0.0
    %557 = vmatprep.subr.mxu0 0.0
    %558 = vmatpush2.msra.mxu0 0.0
    %559 = vmatprep.subr.mxu0 0.0
    %560 = vmatpush2.msra.mxu0 0.0
    %561 = vmatprep.subr.mxu0 0.0
    %562 = vmatpush2.msra.mxu0 0.0
    %563 = vmatprep.subr.mxu0 0.0
    %564 = vmatpush2.msra.mxu0 0.0
    %565 = vmatprep.subr.mxu0 0.0
    %566 = vmatpush2.msra.mxu0 0.0
    %567 = vmatprep.subr.mxu0 0.0
    %568 = vmatpush2.msra.mxu0 0.0
    %569 = vmatprep.subr.mxu0 0.0
    %570 = vmatpush2.msra.mxu0 0.0
    %571 = vmatprep.subr.mxu0 0.0
    %572 = vmatpush2.msra.mxu0 0.0
    %573 = vmatprep.subr.mxu0 0.0
    %574 = vmatpush2.msra.mxu0 0.0
    %575 = vmatprep.subr.mxu0 0.0
    %576 = vmatpush2.msra.mxu0 0.0
    %577 = vmatprep.subr.mxu0 0.0
    %578 = vmatpush2.msra.mxu0 0.0
    %579 = vmatprep.subr.mxu0 0.0
    %580 = vmatpush2.msra.mxu0 0.0
    %581 = vmatprep.mubr.f32.mxu0 0.0
    %582 = vmatmul.mubr.f32.gmra.mxu0 %v515
    %v583 = vpop.f32.mrf.mxu0
    %v584 = vadd.f32 0.0, %v583
    %v585 = vpop.f32.mrf.mxu0
    %586 = vdwg.mxu0
    %v587 = vadd.f32 %v514, %v584
    %v588 = vxor.u32 %v587, 2147483648
    %v589 = vmul.f32 %v588, 1.442695
    %v590 = vpow.pop %v589
    %v591 = vadd.f32 %v590, 1.0
    %v592 = vrcp.pop %v591
    %v593 = vmul.f32 1.0, %v592
    %v594 = vtanh.pop %v587
    %v595 = vmul.f32 %v593, %v500
    %597 = vrot.lane.b32.xlu0 %v594, 64
    %v598 = vpop.permute.xlu0 %597
    %v600 = vmul.f32 %v593, %v598
    %602 = vrot.lane.b32.xlu0 %v600, 32
    %v603 = vpop.permute.xlu0 %602
    %v605 = vadd.f32 %v595, %v603
    %v606 = vtanh.pop %v605
    %608 = vrot.lane.b32.xlu0 %v606, 64
    %v609 = vpop.permute.xlu0 %608
    %v611 = vmul.f32 %v593, %v609
    %613 = vrot.lane.b32.xlu0 %v611, 32
    %v614 = vpop.permute.xlu0 %613
    %s616 = scalar_lea.vmem [#allocation3], 24
    %617 = vst.msk [vmem:[%s616] sm:$0xff] %vm199, %v614
    %s618 = scalar_lea.vmem [#allocation2], 32
    %v619 = vld [vmem:[%s618] sm:$0xff]
    %v620 = vsel %vm199, %v614, 0
    %622 = vmatprep.subr.mxu0 0.0
    %623 = vmatpush1.msra.mxu0 0.0
    %624 = vmatprep.subr.mxu0 0.0
    %625 = vmatpush1.msra.mxu0 0.0
    %626 = vmatprep.subr.mxu0 0.0
    %627 = vmatpush1.msra.mxu0 0.0
    %628 = vmatprep.subr.mxu0 0.0
    %629 = vmatpush1.msra.mxu0 0.0
    %630 = vmatprep.subr.mxu0 0.0
    %631 = vmatpush1.msra.mxu0 0.0
    %632 = vmatprep.subr.mxu0 0.0
    %633 = vmatpush1.msra.mxu0 0.0
    %634 = vmatprep.subr.mxu0 0.0
    %635 = vmatpush1.msra.mxu0 0.0
    %636 = vmatprep.subr.mxu0 0.0
    %637 = vmatpush1.msra.mxu0 0.0
    %638 = vmatprep.subr.mxu0 0.0
    %639 = vmatpush1.msra.mxu0 0.0
    %640 = vmatprep.subr.mxu0 0.0
    %641 = vmatpush1.msra.mxu0 0.0
    %642 = vmatprep.subr.mxu0 0.0
    %643 = vmatpush1.msra.mxu0 0.0
    %644 = vmatprep.subr.mxu0 0.0
    %645 = vmatpush1.msra.mxu0 0.0
    %646 = vmatprep.subr.mxu0 0.0
    %647 = vmatpush1.msra.mxu0 %v197
    %648 = vmatprep.subr.mxu0 0.0
    %649 = vmatpush1.msra.mxu0 %v196
    %650 = vmatprep.subr.mxu0 0.0
    %651 = vmatpush1.msra.mxu0 %v195
    %652 = vmatprep.subr.mxu0 0.0
    %653 = vmatpush1.msra.mxu0 %v194
    %654 = vmatprep.subr.mxu0 0.0
    %655 = vmatpush2.msra.mxu0 0.0
    %656 = vmatprep.subr.mxu0 0.0
    %657 = vmatpush2.msra.mxu0 0.0
    %658 = vmatprep.subr.mxu0 0.0
    %659 = vmatpush2.msra.mxu0 0.0
    %660 = vmatprep.subr.mxu0 0.0
    %661 = vmatpush2.msra.mxu0 0.0
    %662 = vmatprep.subr.mxu0 0.0
    %663 = vmatpush2.msra.mxu0 0.0
    %664 = vmatprep.subr.mxu0 0.0
    %665 = vmatpush2.msra.mxu0 0.0
    %666 = vmatprep.subr.mxu0 0.0
    %667 = vmatpush2.msra.mxu0 0.0
    %668 = vmatprep.subr.mxu0 0.0
    %669 = vmatpush2.msra.mxu0 0.0
    %670 = vmatprep.subr.mxu0 0.0
    %671 = vmatpush2.msra.mxu0 0.0
    %672 = vmatprep.subr.mxu0 0.0
    %673 = vmatpush2.msra.mxu0 0.0
    %674 = vmatprep.subr.mxu0 0.0
    %675 = vmatpush2.msra.mxu0 0.0
    %676 = vmatprep.subr.mxu0 0.0
    %677 = vmatpush2.msra.mxu0 0.0
    %678 = vmatprep.subr.mxu0 0.0
    %679 = vmatpush2.msra.mxu0 0.0
    %680 = vmatprep.subr.mxu0 0.0
    %681 = vmatpush2.msra.mxu0 0.0
    %682 = vmatprep.subr.mxu0 0.0
    %683 = vmatpush2.msra.mxu0 0.0
    %684 = vmatprep.subr.mxu0 0.0
    %685 = vmatpush2.msra.mxu0 0.0
    %686 = vmatprep.mubr.f32.mxu0 0.0
    %687 = vmatmul.mubr.f32.gmra.mxu0 %v620
    %v688 = vpop.f32.mrf.mxu0
    %v689 = vadd.f32 0.0, %v688
    %v690 = vpop.f32.mrf.mxu0
    %691 = vdwg.mxu0
    %v692 = vadd.f32 %v619, %v689
    %v693 = vxor.u32 %v692, 2147483648
    %v694 = vmul.f32 %v693, 1.442695
    %v695 = vpow.pop %v694
    %v696 = vadd.f32 %v695, 1.0
    %v697 = vrcp.pop %v696
    %v698 = vmul.f32 1.0, %v697
    %v699 = vtanh.pop %v692
    %v700 = vmul.f32 %v698, %v605
    %702 = vrot.lane.b32.xlu0 %v699, 64
    %v703 = vpop.permute.xlu0 %702
    %v705 = vmul.f32 %v698, %v703
    %707 = vrot.lane.b32.xlu0 %v705, 32
    %v708 = vpop.permute.xlu0 %707
    %v710 = vadd.f32 %v700, %v708
    %v711 = vtanh.pop %v710
    %713 = vrot.lane.b32.xlu0 %v711, 64
    %v714 = vpop.permute.xlu0 %713
    %v716 = vmul.f32 %v698, %v714
    %718 = vrot.lane.b32.xlu0 %v716, 32
    %v719 = vpop.permute.xlu0 %718
    %s721 = scalar_lea.vmem [#allocation3], 32
    %722 = vst.msk [vmem:[%s721] sm:$0xff] %vm199, %v719
    %s723 = scalar_lea.vmem [#allocation2], 40
    %v724 = vld [vmem:[%s723] sm:$0xff]
    %v725 = vsel %vm199, %v719, 0
    %727 = vmatprep.subr.mxu0 0.0
    %728 = vmatpush1.msra.mxu0 0.0
    %729 = vmatprep.subr.mxu0 0.0
    %730 = vmatpush1.msra.mxu0 0.0
    %731 = vmatprep.subr.mxu0 0.0
    %732 = vmatpush1.msra.mxu0 0.0
    %733 = vmatprep.subr.mxu0 0.0
    %734 = vmatpush1.msra.mxu0 0.0
    %735 = vmatprep.subr.mxu0 0.0
    %736 = vmatpush1.msra.mxu0 0.0
    %737 = vmatprep.subr.mxu0 0.0
    %738 = vmatpush1.msra.mxu0 0.0
    %739 = vmatprep.subr.mxu0 0.0
    %740 = vmatpush1.msra.mxu0 0.0
    %741 = vmatprep.subr.mxu0 0.0
    %742 = vmatpush1.msra.mxu0 0.0
    %743 = vmatprep.subr.mxu0 0.0
    %744 = vmatpush1.msra.mxu0 0.0
    %745 = vmatprep.subr.mxu0 0.0
    %746 = vmatpush1.msra.mxu0 0.0
    %747 = vmatprep.subr.mxu0 0.0
    %748 = vmatpush1.msra.mxu0 0.0
    %749 = vmatprep.subr.mxu0 0.0
    %750 = vmatpush1.msra.mxu0 0.0
    %751 = vmatprep.subr.mxu0 0.0
    %752 = vmatpush1.msra.mxu0 %v197
    %753 = vmatprep.subr.mxu0 0.0
    %754 = vmatpush1.msra.mxu0 %v196
    %755 = vmatprep.subr.mxu0 0.0
    %756 = vmatpush1.msra.mxu0 %v195
    %757 = vmatprep.subr.mxu0 0.0
    %758 = vmatpush1.msra.mxu0 %v194
    %759 = vmatprep.subr.mxu0 0.0
    %760 = vmatpush2.msra.mxu0 0.0
    %761 = vmatprep.subr.mxu0 0.0
    %762 = vmatpush2.msra.mxu0 0.0
    %763 = vmatprep.subr.mxu0 0.0
    %764 = vmatpush2.msra.mxu0 0.0
    %765 = vmatprep.subr.mxu0 0.0
    %766 = vmatpush2.msra.mxu0 0.0
    %767 = vmatprep.subr.mxu0 0.0
    %768 = vmatpush2.msra.mxu0 0.0
    %769 = vmatprep.subr.mxu0 0.0
    %770 = vmatpush2.msra.mxu0 0.0
    %771 = vmatprep.subr.mxu0 0.0
    %772 = vmatpush2.msra.mxu0 0.0
    %773 = vmatprep.subr.mxu0 0.0
    %774 = vmatpush2.msra.mxu0 0.0
    %775 = vmatprep.subr.mxu0 0.0
    %776 = vmatpush2.msra.mxu0 0.0
    %777 = vmatprep.subr.mxu0 0.0
    %778 = vmatpush2.msra.mxu0 0.0
    %779 = vmatprep.subr.mxu0 0.0
    %780 = vmatpush2.msra.mxu0 0.0
    %781 = vmatprep.subr.mxu0 0.0
    %782 = vmatpush2.msra.mxu0 0.0
    %783 = vmatprep.subr.mxu0 0.0
    %784 = vmatpush2.msra.mxu0 0.0
    %785 = vmatprep.subr.mxu0 0.0
    %786 = vmatpush2.msra.mxu0 0.0
    %787 = vmatprep.subr.mxu0 0.0
    %788 = vmatpush2.msra.mxu0 0.0
    %789 = vmatprep.subr.mxu0 0.0
    %790 = vmatpush2.msra.mxu0 0.0
    %791 = vmatprep.mubr.f32.mxu0 0.0
    %792 = vmatmul.mubr.f32.gmra.mxu0 %v725
    %v793 = vpop.f32.mrf.mxu0
    %v794 = vadd.f32 0.0, %v793
    %v795 = vpop.f32.mrf.mxu0
    %796 = vdwg.mxu0
    %v797 = vadd.f32 %v724, %v794
    %v798 = vxor.u32 %v797, 2147483648
    %v799 = vmul.f32 %v798, 1.442695
    %v800 = vpow.pop %v799
    %v801 = vadd.f32 %v800, 1.0
    %v802 = vrcp.pop %v801
    %v803 = vmul.f32 1.0, %v802
    %v804 = vtanh.pop %v797
    %v805 = vmul.f32 %v803, %v710
    %807 = vrot.lane.b32.xlu0 %v804, 64
    %v808 = vpop.permute.xlu0 %807
    %v810 = vmul.f32 %v803, %v808
    %812 = vrot.lane.b32.xlu0 %v810, 32
    %v813 = vpop.permute.xlu0 %812
    %v815 = vadd.f32 %v805, %v813
    %v816 = vtanh.pop %v815
    %818 = vrot.lane.b32.xlu0 %v816, 64
    %v819 = vpop.permute.xlu0 %818
    %v821 = vmul.f32 %v803, %v819
    %823 = vrot.lane.b32.xlu0 %v821, 32
    %v824 = vpop.permute.xlu0 %823
    %s826 = scalar_lea.vmem [#allocation3], 40
    %827 = vst.msk [vmem:[%s826] sm:$0xff] %vm199, %v824
    %s828 = scalar_lea.vmem [#allocation2], 48
    %v829 = vld [vmem:[%s828] sm:$0xff]
    %v830 = vsel %vm199, %v824, 0
    %832 = vmatprep.subr.mxu0 0.0
    %833 = vmatpush1.msra.mxu0 0.0
    %834 = vmatprep.subr.mxu0 0.0
    %835 = vmatpush1.msra.mxu0 0.0
    %836 = vmatprep.subr.mxu0 0.0
    %837 = vmatpush1.msra.mxu0 0.0
    %838 = vmatprep.subr.mxu0 0.0
    %839 = vmatpush1.msra.mxu0 0.0
    %840 = vmatprep.subr.mxu0 0.0
    %841 = vmatpush1.msra.mxu0 0.0
    %842 = vmatprep.subr.mxu0 0.0
    %843 = vmatpush1.msra.mxu0 0.0
    %844 = vmatprep.subr.mxu0 0.0
    %845 = vmatpush1.msra.mxu0 0.0
    %846 = vmatprep.subr.mxu0 0.0
    %847 = vmatpush1.msra.mxu0 0.0
    %848 = vmatprep.subr.mxu0 0.0
    %849 = vmatpush1.msra.mxu0 0.0
    %850 = vmatprep.subr.mxu0 0.0
    %851 = vmatpush1.msra.mxu0 0.0
    %852 = vmatprep.subr.mxu0 0.0
    %853 = vmatpush1.msra.mxu0 0.0
    %854 = vmatprep.subr.mxu0 0.0
    %855 = vmatpush1.msra.mxu0 0.0
    %856 = vmatprep.subr.mxu0 0.0
    %857 = vmatpush1.msra.mxu0 %v197
    %858 = vmatprep.subr.mxu0 0.0
    %859 = vmatpush1.msra.mxu0 %v196
    %860 = vmatprep.subr.mxu0 0.0
    %861 = vmatpush1.msra.mxu0 %v195
    %862 = vmatprep.subr.mxu0 0.0
    %863 = vmatpush1.msra.mxu0 %v194
    %864 = vmatprep.subr.mxu0 0.0
    %865 = vmatpush2.msra.mxu0 0.0
    %866 = vmatprep.subr.mxu0 0.0
    %867 = vmatpush2.msra.mxu0 0.0
    %868 = vmatprep.subr.mxu0 0.0
    %869 = vmatpush2.msra.mxu0 0.0
    %870 = vmatprep.subr.mxu0 0.0
    %871 = vmatpush2.msra.mxu0 0.0
    %872 = vmatprep.subr.mxu0 0.0
    %873 = vmatpush2.msra.mxu0 0.0
    %874 = vmatprep.subr.mxu0 0.0
    %875 = vmatpush2.msra.mxu0 0.0
    %876 = vmatprep.subr.mxu0 0.0
    %877 = vmatpush2.msra.mxu0 0.0
    %878 = vmatprep.subr.mxu0 0.0
    %879 = vmatpush2.msra.mxu0 0.0
    %880 = vmatprep.subr.mxu0 0.0
    %881 = vmatpush2.msra.mxu0 0.0
    %882 = vmatprep.subr.mxu0 0.0
    %883 = vmatpush2.msra.mxu0 0.0
    %884 = vmatprep.subr.mxu0 0.0
    %885 = vmatpush2.msra.mxu0 0.0
    %886 = vmatprep.subr.mxu0 0.0
    %887 = vmatpush2.msra.mxu0 0.0
    %888 = vmatprep.subr.mxu0 0.0
    %889 = vmatpush2.msra.mxu0 0.0
    %890 = vmatprep.subr.mxu0 0.0
    %891 = vmatpush2.msra.mxu0 0.0
    %892 = vmatprep.subr.mxu0 0.0
    %893 = vmatpush2.msra.mxu0 0.0
    %894 = vmatprep.subr.mxu0 0.0
    %895 = vmatpush2.msra.mxu0 0.0
    %896 = vmatprep.mubr.f32.mxu0 0.0
    %897 = vmatmul.mubr.f32.gmra.mxu0 %v830
    %v898 = vpop.f32.mrf.mxu0
    %v899 = vadd.f32 0.0, %v898
    %v900 = vpop.f32.mrf.mxu0
    %901 = vdwg.mxu0
    %v902 = vadd.f32 %v829, %v899
    %v903 = vxor.u32 %v902, 2147483648
    %v904 = vmul.f32 %v903, 1.442695
    %v905 = vpow.pop %v904
    %v906 = vadd.f32 %v905, 1.0
    %v907 = vrcp.pop %v906
    %v908 = vmul.f32 1.0, %v907
    %v909 = vtanh.pop %v902
    %v910 = vmul.f32 %v908, %v815
    %912 = vrot.lane.b32.xlu0 %v909, 64
    %v913 = vpop.permute.xlu0 %912
    %v915 = vmul.f32 %v908, %v913
    %917 = vrot.lane.b32.xlu0 %v915, 32
    %v918 = vpop.permute.xlu0 %917
    %v920 = vadd.f32 %v910, %v918
    %v921 = vtanh.pop %v920
    %923 = vrot.lane.b32.xlu0 %v921, 64
    %v924 = vpop.permute.xlu0 %923
    %v926 = vmul.f32 %v908, %v924
    %928 = vrot.lane.b32.xlu0 %v926, 32
    %v929 = vpop.permute.xlu0 %928
    %s931 = scalar_lea.vmem [#allocation3], 48
    %932 = vst.msk [vmem:[%s931] sm:$0xff] %vm199, %v929
    %s933 = scalar_lea.vmem [#allocation2], 56
    %v934 = vld [vmem:[%s933] sm:$0xff]
    %v935 = vsel %vm199, %v929, 0
    %937 = vmatprep.subr.mxu0 0.0
    %938 = vmatpush1.msra.mxu0 0.0
    %939 = vmatprep.subr.mxu0 0.0
    %940 = vmatpush1.msra.mxu0 0.0
    %941 = vmatprep.subr.mxu0 0.0
    %942 = vmatpush1.msra.mxu0 0.0
    %943 = vmatprep.subr.mxu0 0.0
    %944 = vmatpush1.msra.mxu0 0.0
    %945 = vmatprep.subr.mxu0 0.0
    %946 = vmatpush1.msra.mxu0 0.0
    %947 = vmatprep.subr.mxu0 0.0
    %948 = vmatpush1.msra.mxu0 0.0
    %949 = vmatprep.subr.mxu0 0.0
    %950 = vmatpush1.msra.mxu0 0.0
    %951 = vmatprep.subr.mxu0 0.0
    %952 = vmatpush1.msra.mxu0 0.0
    %953 = vmatprep.subr.mxu0 0.0
    %954 = vmatpush1.msra.mxu0 0.0
    %955 = vmatprep.subr.mxu0 0.0
    %956 = vmatpush1.msra.mxu0 0.0
    %957 = vmatprep.subr.mxu0 0.0
    %958 = vmatpush1.msra.mxu0 0.0
    %959 = vmatprep.subr.mxu0 0.0
    %960 = vmatpush1.msra.mxu0 0.0
    %961 = vmatprep.subr.mxu0 0.0
    %962 = vmatpush1.msra.mxu0 %v197
    %963 = vmatprep.subr.mxu0 0.0
    %964 = vmatpush1.msra.mxu0 %v196
    %965 = vmatprep.subr.mxu0 0.0
    %966 = vmatpush1.msra.mxu0 %v195
    %967 = vmatprep.subr.mxu0 0.0
    %968 = vmatpush1.msra.mxu0 %v194
    %969 = vmatprep.subr.mxu0 0.0
    %970 = vmatpush2.msra.mxu0 0.0
    %971 = vmatprep.subr.mxu0 0.0
    %972 = vmatpush2.msra.mxu0 0.0
    %973 = vmatprep.subr.mxu0 0.0
    %974 = vmatpush2.msra.mxu0 0.0
    %975 = vmatprep.subr.mxu0 0.0
    %976 = vmatpush2.msra.mxu0 0.0
    %977 = vmatprep.subr.mxu0 0.0
    %978 = vmatpush2.msra.mxu0 0.0
    %979 = vmatprep.subr.mxu0 0.0
    %980 = vmatpush2.msra.mxu0 0.0
    %981 = vmatprep.subr.mxu0 0.0
    %982 = vmatpush2.msra.mxu0 0.0
    %983 = vmatprep.subr.mxu0 0.0
    %984 = vmatpush2.msra.mxu0 0.0
    %985 = vmatprep.subr.mxu0 0.0
    %986 = vmatpush2.msra.mxu0 0.0
    %987 = vmatprep.subr.mxu0 0.0
    %988 = vmatpush2.msra.mxu0 0.0
    %989 = vmatprep.subr.mxu0 0.0
    %990 = vmatpush2.msra.mxu0 0.0
    %991 = vmatprep.subr.mxu0 0.0
    %992 = vmatpush2.msra.mxu0 0.0
    %993 = vmatprep.subr.mxu0 0.0
    %994 = vmatpush2.msra.mxu0 0.0
    %995 = vmatprep.subr.mxu0 0.0
    %996 = vmatpush2.msra.mxu0 0.0
    %997 = vmatprep.subr.mxu0 0.0
    %998 = vmatpush2.msra.mxu0 0.0
    %999 = vmatprep.subr.mxu0 0.0
    %1000 = vmatpush2.msra.mxu0 0.0
    %1001 = vmatprep.mubr.f32.mxu0 0.0
    %1002 = vmatmul.mubr.f32.gmra.mxu0 %v935
    %v1003 = vpop.f32.mrf.mxu0
    %v1004 = vadd.f32 0.0, %v1003
    %v1005 = vpop.f32.mrf.mxu0
    %1006 = vdwg.mxu0
    %v1007 = vadd.f32 %v934, %v1004
    %v1008 = vxor.u32 %v1007, 2147483648
    %v1009 = vmul.f32 %v1008, 1.442695
    %v1010 = vpow.pop %v1009
    %v1011 = vadd.f32 %v1010, 1.0
    %v1012 = vrcp.pop %v1011
    %v1013 = vmul.f32 1.0, %v1012
    %v1014 = vtanh.pop %v1007
    %v1015 = vmul.f32 %v1013, %v920
    %1017 = vrot.lane.b32.xlu0 %v1014, 64
    %v1018 = vpop.permute.xlu0 %1017
    %v1020 = vmul.f32 %v1013, %v1018
    %1022 = vrot.lane.b32.xlu0 %v1020, 32
    %v1023 = vpop.permute.xlu0 %1022
    %v1025 = vadd.f32 %v1015, %v1023
    %v1026 = vtanh.pop %v1025
    %1028 = vrot.lane.b32.xlu0 %v1026, 64
    %v1029 = vpop.permute.xlu0 %1028
    %v1031 = vmul.f32 %v1013, %v1029
    %1033 = vrot.lane.b32.xlu0 %v1031, 32
    %v1034 = vpop.permute.xlu0 %1033
    %s1036 = scalar_lea.vmem [#allocation3], 56
    %1037 = vst.msk [vmem:[%s1036] sm:$0xff] %vm199, %v1034
    %v1038 = vld [vmem:[#allocation3] sm:$0xff]
    %v1039 = vld [vmem:[#allocation3 + $0x8] sm:$0xff]
    %v1040 = vld [vmem:[#allocation3 + $0x10] sm:$0xff]
    %v1041 = vld [vmem:[#allocation3 + $0x18] sm:$0xff]
    %v1042 = vld [vmem:[#allocation3 + $0x20] sm:$0xff]
    %v1043 = vld [vmem:[#allocation3 + $0x28] sm:$0xff]
    %v1044 = vld [vmem:[#allocation3 + $0x30] sm:$0xff]
    %v1045 = vld [vmem:[#allocation3 + $0x38] sm:$0xff]
    %v1046 = vld [vmem:[%s4] sm:$0xff]
    %v1047 = vld [vmem:[%s4 + $0x8] sm:$0xff]
    %v1048 = vld [vmem:[%s4 + $0x10] sm:$0xff]
    %v1049 = vld [vmem:[%s4 + $0x18] sm:$0xff]
    %v1050 = vld [vmem:[%s6] sm:$0x1]
    %v1052 = vlaneseq
    %v1053 = vshrl.u32 %v1052, 7
    %v1054 = vsub.s32 0, %v1053
    %v1055 = vrot.slane %v1050, %v1054
    %v1058 = vsel %vm199, %v1038, 0
    %v1061 = vsel %vm199, %v1039, 0
    %v1064 = vsel %vm199, %v1040, 0
    %v1067 = vsel %vm199, %v1041, 0
    %v1070 = vsel %vm199, %v1042, 0
    %v1073 = vsel %vm199, %v1043, 0
    %v1076 = vsel %vm199, %v1044, 0
    %v1079 = vsel %vm199, %v1045, 0
    %1081 = vmatprep.subr.mxu0 0.0
    %1082 = vmatpush1.msra.mxu0 0.0
    %1083 = vmatprep.subr.mxu0 0.0
    %1084 = vmatpush1.msra.mxu0 0.0
    %1085 = vmatprep.subr.mxu0 0.0
    %1086 = vmatpush1.msra.mxu0 0.0
    %1087 = vmatprep.subr.mxu0 0.0
    %1088 = vmatpush1.msra.mxu0 0.0
    %1089 = vmatprep.subr.mxu0 0.0
    %1090 = vmatpush1.msra.mxu0 0.0
    %1091 = vmatprep.subr.mxu0 0.0
    %1092 = vmatpush1.msra.mxu0 0.0
    %1093 = vmatprep.subr.mxu0 0.0
    %1094 = vmatpush1.msra.mxu0 0.0
    %1095 = vmatprep.subr.mxu0 0.0
    %1096 = vmatpush1.msra.mxu0 0.0
    %1097 = vmatprep.subr.mxu0 0.0
    %1098 = vmatpush1.msra.mxu0 0.0
    %1099 = vmatprep.subr.mxu0 0.0
    %1100 = vmatpush1.msra.mxu0 0.0
    %1101 = vmatprep.subr.mxu0 0.0
    %1102 = vmatpush1.msra.mxu0 0.0
    %1103 = vmatprep.subr.mxu0 0.0
    %1104 = vmatpush1.msra.mxu0 0.0
    %1105 = vmatprep.subr.mxu0 0.0
    %1106 = vmatpush1.msra.mxu0 %v1049
    %1107 = vmatprep.subr.mxu0 0.0
    %1108 = vmatpush1.msra.mxu0 %v1048
    %1109 = vmatprep.subr.mxu0 0.0
    %1110 = vmatpush1.msra.mxu0 %v1047
    %1111 = vmatprep.subr.mxu0 0.0
    %1112 = vmatpush1.msra.mxu0 %v1046
    %1113 = vmatprep.subr.mxu0 0.0
    %1114 = vmatpush2.msra.mxu0 0.0
    %1115 = vmatprep.subr.mxu0 0.0
    %1116 = vmatpush2.msra.mxu0 0.0
    %1117 = vmatprep.subr.mxu0 0.0
    %1118 = vmatpush2.msra.mxu0 0.0
    %1119 = vmatprep.subr.mxu0 0.0
    %1120 = vmatpush2.msra.mxu0 0.0
    %1121 = vmatprep.subr.mxu0 0.0
    %1122 = vmatpush2.msra.mxu0 0.0
    %1123 = vmatprep.subr.mxu0 0.0
    %1124 = vmatpush2.msra.mxu0 0.0
    %1125 = vmatprep.subr.mxu0 0.0
    %1126 = vmatpush2.msra.mxu0 0.0
    %1127 = vmatprep.subr.mxu0 0.0
    %1128 = vmatpush2.msra.mxu0 0.0
    %1129 = vmatprep.subr.mxu0 0.0
    %1130 = vmatpush2.msra.mxu0 0.0
    %1131 = vmatprep.subr.mxu0 0.0
    %1132 = vmatpush2.msra.mxu0 0.0
    %1133 = vmatprep.subr.mxu0 0.0
    %1134 = vmatpush2.msra.mxu0 0.0
    %1135 = vmatprep.subr.mxu0 0.0
    %1136 = vmatpush2.msra.mxu0 0.0
    %1137 = vmatprep.subr.mxu0 0.0
    %1138 = vmatpush2.msra.mxu0 0.0
    %1139 = vmatprep.subr.mxu0 0.0
    %1140 = vmatpush2.msra.mxu0 0.0
    %1141 = vmatprep.subr.mxu0 0.0
    %1142 = vmatpush2.msra.mxu0 0.0
    %1143 = vmatprep.subr.mxu0 0.0
    %1144 = vmatpush2.msra.mxu0 0.0
    %1145 = vmatprep.mubr.f32.mxu0 0.0
    %1146 = vmatmul.mubr.f32.gmra.mxu0 %v1058
    %v1147 = vpop.f32.mrf.mxu0
    %v1148 = vadd.f32 %v1055, %v1147
    %v1149 = vpop.f32.mrf.mxu0
    %1150 = vmatprep.mubr.f32.mxu0 0.0
    %1151 = vmatmul.mubr.f32.gmra.mxu0 %v1061
    %v1152 = vpop.f32.mrf.mxu0
    %v1153 = vadd.f32 %v1055, %v1152
    %v1154 = vpop.f32.mrf.mxu0
    %1155 = vmatprep.mubr.f32.mxu0 0.0
    %1156 = vmatmul.mubr.f32.gmra.mxu0 %v1064
    %v1157 = vpop.f32.mrf.mxu0
    %v1158 = vadd.f32 %v1055, %v1157
    %v1159 = vpop.f32.mrf.mxu0
    %1160 = vmatprep.mubr.f32.mxu0 0.0
    %1161 = vmatmul.mubr.f32.gmra.mxu0 %v1067
    %v1162 = vpop.f32.mrf.mxu0
    %v1163 = vadd.f32 %v1055, %v1162
    %v1164 = vpop.f32.mrf.mxu0
    %1165 = vmatprep.mubr.f32.mxu0 0.0
    %1166 = vmatmul.mubr.f32.gmra.mxu0 %v1070
    %v1167 = vpop.f32.mrf.mxu0
    %v1168 = vadd.f32 %v1055, %v1167
    %v1169 = vpop.f32.mrf.mxu0
    %1170 = vmatprep.mubr.f32.mxu0 0.0
    %1171 = vmatmul.mubr.f32.gmra.mxu0 %v1073
    %v1172 = vpop.f32.mrf.mxu0
    %v1173 = vadd.f32 %v1055, %v1172
    %v1174 = vpop.f32.mrf.mxu0
    %1175 = vmatprep.mubr.f32.mxu0 0.0
    %1176 = vmatmul.mubr.f32.gmra.mxu0 %v1076
    %v1177 = vpop.f32.mrf.mxu0
    %v1178 = vadd.f32 %v1055, %v1177
    %v1179 = vpop.f32.mrf.mxu0
    %1180 = vmatprep.mubr.f32.mxu0 0.0
    %1181 = vmatmul.mubr.f32.gmra.mxu0 %v1079
    %v1182 = vpop.f32.mrf.mxu0
    %v1183 = vadd.f32 %v1055, %v1182
    %v1184 = vpop.f32.mrf.mxu0
    %1185 = vdwg.mxu0
    %1186 = vst [vmem:[#allocation2] sm:$0xff] %v1148
    %1187 = vst [vmem:[#allocation2 + $0x8] sm:$0xff] %v1153
    %1188 = vst [vmem:[#allocation2 + $0x10] sm:$0xff] %v1158
    %1189 = vst [vmem:[#allocation2 + $0x18] sm:$0xff] %v1163
    %1190 = vst [vmem:[#allocation2 + $0x20] sm:$0xff] %v1168
    %1191 = vst [vmem:[#allocation2 + $0x28] sm:$0xff] %v1173
    %1192 = vst [vmem:[#allocation2 + $0x30] sm:$0xff] %v1178
    %1193 = vst [vmem:[#allocation2 + $0x38] sm:$0xff] %v1183
    %v1194 = vld [vmem:[#allocation4] sm:$0xff]
    %v1195 = vld [vmem:[#allocation4 + $0x8] sm:$0xff]
    %v1196 = vld [vmem:[#allocation4 + $0x10] sm:$0xff]
    %v1197 = vld [vmem:[#allocation4 + $0x18] sm:$0xff]
    %v1198 = vld [vmem:[#allocation2] sm:$0xff]
    %1199 = vmatprep.subr.mxu0 0.0
    %1200 = vmatpush1.msra.mxu0 0.0
    %1201 = vmatprep.subr.mxu0 0.0
    %1202 = vmatpush1.msra.mxu0 0.0
    %1203 = vmatprep.subr.mxu0 0.0
    %1204 = vmatpush1.msra.mxu0 0.0
    %1205 = vmatprep.subr.mxu0 0.0
    %1206 = vmatpush1.msra.mxu0 0.0
    %1207 = vmatprep.subr.mxu0 0.0
    %1208 = vmatpush1.msra.mxu0 0.0
    %1209 = vmatprep.subr.mxu0 0.0
    %1210 = vmatpush1.msra.mxu0 0.0
    %1211 = vmatprep.subr.mxu0 0.0
    %1212 = vmatpush1.msra.mxu0 0.0
    %1213 = vmatprep.subr.mxu0 0.0
    %1214 = vmatpush1.msra.mxu0 0.0
    %1215 = vmatprep.subr.mxu0 0.0
    %1216 = vmatpush1.msra.mxu0 0.0
    %1217 = vmatprep.subr.mxu0 0.0
    %1218 = vmatpush1.msra.mxu0 0.0
    %1219 = vmatprep.subr.mxu0 0.0
    %1220 = vmatpush1.msra.mxu0 0.0
    %1221 = vmatprep.subr.mxu0 0.0
    %1222 = vmatpush1.msra.mxu0 0.0
    %1223 = vmatprep.subr.mxu0 0.0
    %1224 = vmatpush1.msra.mxu0 %v1197
    %1225 = vmatprep.subr.mxu0 0.0
    %1226 = vmatpush1.msra.mxu0 %v1196
    %1227 = vmatprep.subr.mxu0 0.0
    %1228 = vmatpush1.msra.mxu0 %v1195
    %1229 = vmatprep.subr.mxu0 0.0
    %1230 = vmatpush1.msra.mxu0 %v1194
    %1231 = vmatprep.subr.mxu0 0.0
    %1232 = vmatpush2.msra.mxu0 0.0
    %1233 = vmatprep.subr.mxu0 0.0
    %1234 = vmatpush2.msra.mxu0 0.0
    %1235 = vmatprep.subr.mxu0 0.0
    %1236 = vmatpush2.msra.mxu0 0.0
    %1237 = vmatprep.subr.mxu0 0.0
    %1238 = vmatpush2.msra.mxu0 0.0
    %1239 = vmatprep.subr.mxu0 0.0
    %1240 = vmatpush2.msra.mxu0 0.0
    %1241 = vmatprep.subr.mxu0 0.0
    %1242 = vmatpush2.msra.mxu0 0.0
    %1243 = vmatprep.subr.mxu0 0.0
    %1244 = vmatpush2.msra.mxu0 0.0
    %1245 = vmatprep.subr.mxu0 0.0
    %1246 = vmatpush2.msra.mxu0 0.0
    %1247 = vmatprep.subr.mxu0 0.0
    %1248 = vmatpush2.msra.mxu0 0.0
    %1249 = vmatprep.subr.mxu0 0.0
    %1250 = vmatpush2.msra.mxu0 0.0
    %1251 = vmatprep.subr.mxu0 0.0
    %1252 = vmatpush2.msra.mxu0 0.0
    %1253 = vmatprep.subr.mxu0 0.0
    %1254 = vmatpush2.msra.mxu0 0.0
    %1255 = vmatprep.subr.mxu0 0.0
    %1256 = vmatpush2.msra.mxu0 0.0
    %1257 = vmatprep.subr.mxu0 0.0
    %1258 = vmatpush2.msra.mxu0 0.0
    %1259 = vmatprep.subr.mxu0 0.0
    %1260 = vmatpush2.msra.mxu0 0.0
    %1261 = vmatprep.subr.mxu0 0.0
    %1262 = vmatpush2.msra.mxu0 0.0
    %1263 = vmatprep.mubr.f32.mxu0 0.0
    %1264 = vmatmul.mubr.f32.gmra.mxu0 %v201
    %v1265 = vpop.f32.mrf.mxu0
    %v1266 = vadd.f32 0.0, %v1265
    %v1267 = vpop.f32.mrf.mxu0
    %1268 = vdwg.mxu0
    %v1269 = vadd.f32 %v1198, %v1266
    %v1270 = vxor.u32 %v1269, 2147483648
    %v1271 = vmul.f32 %v1270, 1.442695
    %v1272 = vpow.pop %v1271
    %v1273 = vadd.f32 %v1272, 1.0
    %v1274 = vrcp.pop %v1273
    %v1275 = vmul.f32 1.0, %v1274
    %v1276 = vtanh.pop %v1269
    %v1277 = vmul.f32 %v1275, 0.0
    %1279 = vrot.lane.b32.xlu0 %v1276, 64
    %v1280 = vpop.permute.xlu0 %1279
    %v1282 = vmul.f32 %v1275, %v1280
    %1284 = vrot.lane.b32.xlu0 %v1282, 32
    %v1285 = vpop.permute.xlu0 %1284
    %v1287 = vadd.f32 %v1277, %v1285
    %v1288 = vtanh.pop %v1287
    %1290 = vrot.lane.b32.xlu0 %v1288, 64
    %v1291 = vpop.permute.xlu0 %1290
    %v1293 = vmul.f32 %v1275, %v1291
    %1295 = vrot.lane.b32.xlu0 %v1293, 32
    %v1296 = vpop.permute.xlu0 %1295
    %1298 = vst.msk [vmem:[%s7] sm:$0xff] %vm199, %v1296
    %v1299 = vld [vmem:[%s303] sm:$0xff]
    %v1300 = vsel %vm199, %v1296, 0
    %1302 = vmatprep.subr.mxu0 0.0
    %1303 = vmatpush1.msra.mxu0 0.0
    %1304 = vmatprep.subr.mxu0 0.0
    %1305 = vmatpush1.msra.mxu0 0.0
    %1306 = vmatprep.subr.mxu0 0.0
    %1307 = vmatpush1.msra.mxu0 0.0
    %1308 = vmatprep.subr.mxu0 0.0
    %1309 = vmatpush1.msra.mxu0 0.0
    %1310 = vmatprep.subr.mxu0 0.0
    %1311 = vmatpush1.msra.mxu0 0.0
    %1312 = vmatprep.subr.mxu0 0.0
    %1313 = vmatpush1.msra.mxu0 0.0
    %1314 = vmatprep.subr.mxu0 0.0
    %1315 = vmatpush1.msra.mxu0 0.0
    %1316 = vmatprep.subr.mxu0 0.0
    %1317 = vmatpush1.msra.mxu0 0.0
    %1318 = vmatprep.subr.mxu0 0.0
    %1319 = vmatpush1.msra.mxu0 0.0
    %1320 = vmatprep.subr.mxu0 0.0
    %1321 = vmatpush1.msra.mxu0 0.0
    %1322 = vmatprep.subr.mxu0 0.0
    %1323 = vmatpush1.msra.mxu0 0.0
    %1324 = vmatprep.subr.mxu0 0.0
    %1325 = vmatpush1.msra.mxu0 0.0
    %1326 = vmatprep.subr.mxu0 0.0
    %1327 = vmatpush1.msra.mxu0 %v1197
    %1328 = vmatprep.subr.mxu0 0.0
    %1329 = vmatpush1.msra.mxu0 %v1196
    %1330 = vmatprep.subr.mxu0 0.0
    %1331 = vmatpush1.msra.mxu0 %v1195
    %1332 = vmatprep.subr.mxu0 0.0
    %1333 = vmatpush1.msra.mxu0 %v1194
    %1334 = vmatprep.subr.mxu0 0.0
    %1335 = vmatpush2.msra.mxu0 0.0
    %1336 = vmatprep.subr.mxu0 0.0
    %1337 = vmatpush2.msra.mxu0 0.0
    %1338 = vmatprep.subr.mxu0 0.0
    %1339 = vmatpush2.msra.mxu0 0.0
    %1340 = vmatprep.subr.mxu0 0.0
    %1341 = vmatpush2.msra.mxu0 0.0
    %1342 = vmatprep.subr.mxu0 0.0
    %1343 = vmatpush2.msra.mxu0 0.0
    %1344 = vmatprep.subr.mxu0 0.0
    %1345 = vmatpush2.msra.mxu0 0.0
    %1346 = vmatprep.subr.mxu0 0.0
    %1347 = vmatpush2.msra.mxu0 0.0
    %1348 = vmatprep.subr.mxu0 0.0
    %1349 = vmatpush2.msra.mxu0 0.0
    %1350 = vmatprep.subr.mxu0 0.0
    %1351 = vmatpush2.msra.mxu0 0.0
    %1352 = vmatprep.subr.mxu0 0.0
    %1353 = vmatpush2.msra.mxu0 0.0
    %1354 = vmatprep.subr.mxu0 0.0
    %1355 = vmatpush2.msra.mxu0 0.0
    %1356 = vmatprep.subr.mxu0 0.0
    %1357 = vmatpush2.msra.mxu0 0.0
    %1358 = vmatprep.subr.mxu0 0.0
    %1359 = vmatpush2.msra.mxu0 0.0
    %1360 = vmatprep.subr.mxu0 0.0
    %1361 = vmatpush2.msra.mxu0 0.0
    %1362 = vmatprep.subr.mxu0 0.0
    %1363 = vmatpush2.msra.mxu0 0.0
    %1364 = vmatprep.subr.mxu0 0.0
    %1365 = vmatpush2.msra.mxu0 0.0
    %1366 = vmatprep.mubr.f32.mxu0 0.0
    %1367 = vmatmul.mubr.f32.gmra.mxu0 %v1300
    %v1368 = vpop.f32.mrf.mxu0
    %v1369 = vadd.f32 0.0, %v1368
    %v1370 = vpop.f32.mrf.mxu0
    %1371 = vdwg.mxu0
    %v1372 = vadd.f32 %v1299, %v1369
    %v1373 = vxor.u32 %v1372, 2147483648
    %v1374 = vmul.f32 %v1373, 1.442695
    %v1375 = vpow.pop %v1374
    %v1376 = vadd.f32 %v1375, 1.0
    %v1377 = vrcp.pop %v1376
    %v1378 = vmul.f32 1.0, %v1377
    %v1379 = vtanh.pop %v1372
    %v1380 = vmul.f32 %v1378, %v1287
    %1382 = vrot.lane.b32.xlu0 %v1379, 64
    %v1383 = vpop.permute.xlu0 %1382
    %v1385 = vmul.f32 %v1378, %v1383
    %1387 = vrot.lane.b32.xlu0 %v1385, 32
    %v1388 = vpop.permute.xlu0 %1387
    %v1390 = vadd.f32 %v1380, %v1388
    %v1391 = vtanh.pop %v1390
    %1393 = vrot.lane.b32.xlu0 %v1391, 64
    %v1394 = vpop.permute.xlu0 %1393
    %v1396 = vmul.f32 %v1378, %v1394
    %1398 = vrot.lane.b32.xlu0 %v1396, 32
    %v1399 = vpop.permute.xlu0 %1398
    %s1401 = scalar_lea.vmem %s7, 8
    %1402 = vst.msk [vmem:[%s1401] sm:$0xff] %vm199, %v1399
    %v1403 = vld [vmem:[%s408] sm:$0xff]
    %v1404 = vsel %vm199, %v1399, 0
    %1406 = vmatprep.subr.mxu0 0.0
    %1407 = vmatpush1.msra.mxu0 0.0
    %1408 = vmatprep.subr.mxu0 0.0
    %1409 = vmatpush1.msra.mxu0 0.0
    %1410 = vmatprep.subr.mxu0 0.0
    %1411 = vmatpush1.msra.mxu0 0.0
    %1412 = vmatprep.subr.mxu0 0.0
    %1413 = vmatpush1.msra.mxu0 0.0
    %1414 = vmatprep.subr.mxu0 0.0
    %1415 = vmatpush1.msra.mxu0 0.0
    %1416 = vmatprep.subr.mxu0 0.0
    %1417 = vmatpush1.msra.mxu0 0.0
    %1418 = vmatprep.subr.mxu0 0.0
    %1419 = vmatpush1.msra.mxu0 0.0
    %1420 = vmatprep.subr.mxu0 0.0
    %1421 = vmatpush1.msra.mxu0 0.0
    %1422 = vmatprep.subr.mxu0 0.0
    %1423 = vmatpush1.msra.mxu0 0.0
    %1424 = vmatprep.subr.mxu0 0.0
    %1425 = vmatpush1.msra.mxu0 0.0
    %1426 = vmatprep.subr.mxu0 0.0
    %1427 = vmatpush1.msra.mxu0 0.0
    %1428 = vmatprep.subr.mxu0 0.0
    %1429 = vmatpush1.msra.mxu0 0.0
    %1430 = vmatprep.subr.mxu0 0.0
    %1431 = vmatpush1.msra.mxu0 %v1197
    %1432 = vmatprep.subr.mxu0 0.0
    %1433 = vmatpush1.msra.mxu0 %v1196
    %1434 = vmatprep.subr.mxu0 0.0
    %1435 = vmatpush1.msra.mxu0 %v1195
    %1436 = vmatprep.subr.mxu0 0.0
    %1437 = vmatpush1.msra.mxu0 %v1194
    %1438 = vmatprep.subr.mxu0 0.0
    %1439 = vmatpush2.msra.mxu0 0.0
    %1440 = vmatprep.subr.mxu0 0.0
    %1441 = vmatpush2.msra.mxu0 0.0
    %1442 = vmatprep.subr.mxu0 0.0
    %1443 = vmatpush2.msra.mxu0 0.0
    %1444 = vmatprep.subr.mxu0 0.0
    %1445 = vmatpush2.msra.mxu0 0.0
    %1446 = vmatprep.subr.mxu0 0.0
    %1447 = vmatpush2.msra.mxu0 0.0
    %1448 = vmatprep.subr.mxu0 0.0
    %1449 = vmatpush2.msra.mxu0 0.0
    %1450 = vmatprep.subr.mxu0 0.0
    %1451 = vmatpush2.msra.mxu0 0.0
    %1452 = vmatprep.subr.mxu0 0.0
    %1453 = vmatpush2.msra.mxu0 0.0
    %1454 = vmatprep.subr.mxu0 0.0
    %1455 = vmatpush2.msra.mxu0 0.0
    %1456 = vmatprep.subr.mxu0 0.0
    %1457 = vmatpush2.msra.mxu0 0.0
    %1458 = vmatprep.subr.mxu0 0.0
    %1459 = vmatpush2.msra.mxu0 0.0
    %1460 = vmatprep.subr.mxu0 0.0
    %1461 = vmatpush2.msra.mxu0 0.0
    %1462 = vmatprep.subr.mxu0 0.0
    %1463 = vmatpush2.msra.mxu0 0.0
    %1464 = vmatprep.subr.mxu0 0.0
    %1465 = vmatpush2.msra.mxu0 0.0
    %1466 = vmatprep.subr.mxu0 0.0
    %1467 = vmatpush2.msra.mxu0 0.0
    %1468 = vmatprep.subr.mxu0 0.0
    %1469 = vmatpush2.msra.mxu0 0.0
    %1470 = vmatprep.mubr.f32.mxu0 0.0
    %1471 = vmatmul.mubr.f32.gmra.mxu0 %v1404
    %v1472 = vpop.f32.mrf.mxu0
    %v1473 = vadd.f32 0.0, %v1472
    %v1474 = vpop.f32.mrf.mxu0
    %1475 = vdwg.mxu0
    %v1476 = vadd.f32 %v1403, %v1473
    %v1477 = vxor.u32 %v1476, 2147483648
    %v1478 = vmul.f32 %v1477, 1.442695
    %v1479 = vpow.pop %v1478
    %v1480 = vadd.f32 %v1479, 1.0
    %v1481 = vrcp.pop %v1480
    %v1482 = vmul.f32 1.0, %v1481
    %v1483 = vtanh.pop %v1476
    %v1484 = vmul.f32 %v1482, %v1390
    %1486 = vrot.lane.b32.xlu0 %v1483, 64
    %v1487 = vpop.permute.xlu0 %1486
    %v1489 = vmul.f32 %v1482, %v1487
    %1491 = vrot.lane.b32.xlu0 %v1489, 32
    %v1492 = vpop.permute.xlu0 %1491
    %v1494 = vadd.f32 %v1484, %v1492
    %v1495 = vtanh.pop %v1494
    %1497 = vrot.lane.b32.xlu0 %v1495, 64
    %v1498 = vpop.permute.xlu0 %1497
    %v1500 = vmul.f32 %v1482, %v1498
    %1502 = vrot.lane.b32.xlu0 %v1500, 32
    %v1503 = vpop.permute.xlu0 %1502
    %s1505 = scalar_lea.vmem %s7, 16
    %1506 = vst.msk [vmem:[%s1505] sm:$0xff] %vm199, %v1503
    %v1507 = vld [vmem:[%s513] sm:$0xff]
    %v1508 = vsel %vm199, %v1503, 0
    %1510 = vmatprep.subr.mxu0 0.0
    %1511 = vmatpush1.msra.mxu0 0.0
    %1512 = vmatprep.subr.mxu0 0.0
    %1513 = vmatpush1.msra.mxu0 0.0
    %1514 = vmatprep.subr.mxu0 0.0
    %1515 = vmatpush1.msra.mxu0 0.0
    %1516 = vmatprep.subr.mxu0 0.0
    %1517 = vmatpush1.msra.mxu0 0.0
    %1518 = vmatprep.subr.mxu0 0.0
    %1519 = vmatpush1.msra.mxu0 0.0
    %1520 = vmatprep.subr.mxu0 0.0
    %1521 = vmatpush1.msra.mxu0 0.0
    %1522 = vmatprep.subr.mxu0 0.0
    %1523 = vmatpush1.msra.mxu0 0.0
    %1524 = vmatprep.subr.mxu0 0.0
    %1525 = vmatpush1.msra.mxu0 0.0
    %1526 = vmatprep.subr.mxu0 0.0
    %1527 = vmatpush1.msra.mxu0 0.0
    %1528 = vmatprep.subr.mxu0 0.0
    %1529 = vmatpush1.msra.mxu0 0.0
    %1530 = vmatprep.subr.mxu0 0.0
    %1531 = vmatpush1.msra.mxu0 0.0
    %1532 = vmatprep.subr.mxu0 0.0
    %1533 = vmatpush1.msra.mxu0 0.0
    %1534 = vmatprep.subr.mxu0 0.0
    %1535 = vmatpush1.msra.mxu0 %v1197
    %1536 = vmatprep.subr.mxu0 0.0
    %1537 = vmatpush1.msra.mxu0 %v1196
    %1538 = vmatprep.subr.mxu0 0.0
    %1539 = vmatpush1.msra.mxu0 %v1195
    %1540 = vmatprep.subr.mxu0 0.0
    %1541 = vmatpush1.msra.mxu0 %v1194
    %1542 = vmatprep.subr.mxu0 0.0
    %1543 = vmatpush2.msra.mxu0 0.0
    %1544 = vmatprep.subr.mxu0 0.0
    %1545 = vmatpush2.msra.mxu0 0.0
    %1546 = vmatprep.subr.mxu0 0.0
    %1547 = vmatpush2.msra.mxu0 0.0
    %1548 = vmatprep.subr.mxu0 0.0
    %1549 = vmatpush2.msra.mxu0 0.0
    %1550 = vmatprep.subr.mxu0 0.0
    %1551 = vmatpush2.msra.mxu0 0.0
    %1552 = vmatprep.subr.mxu0 0.0
    %1553 = vmatpush2.msra.mxu0 0.0
    %1554 = vmatprep.subr.mxu0 0.0
    %1555 = vmatpush2.msra.mxu0 0.0
    %1556 = vmatprep.subr.mxu0 0.0
    %1557 = vmatpush2.msra.mxu0 0.0
    %1558 = vmatprep.subr.mxu0 0.0
    %1559 = vmatpush2.msra.mxu0 0.0
    %1560 = vmatprep.subr.mxu0 0.0
    %1561 = vmatpush2.msra.mxu0 0.0
    %1562 = vmatprep.subr.mxu0 0.0
    %1563 = vmatpush2.msra.mxu0 0.0
    %1564 = vmatprep.subr.mxu0 0.0
    %1565 = vmatpush2.msra.mxu0 0.0
    %1566 = vmatprep.subr.mxu0 0.0
    %1567 = vmatpush2.msra.mxu0 0.0
    %1568 = vmatprep.subr.mxu0 0.0
    %1569 = vmatpush2.msra.mxu0 0.0
    %1570 = vmatprep.subr.mxu0 0.0
    %1571 = vmatpush2.msra.mxu0 0.0
    %1572 = vmatprep.subr.mxu0 0.0
    %1573 = vmatpush2.msra.mxu0 0.0
    %1574 = vmatprep.mubr.f32.mxu0 0.0
    %1575 = vmatmul.mubr.f32.gmra.mxu0 %v1508
    %v1576 = vpop.f32.mrf.mxu0
    %v1577 = vadd.f32 0.0, %v1576
    %v1578 = vpop.f32.mrf.mxu0
    %1579 = vdwg.mxu0
    %v1580 = vadd.f32 %v1507, %v1577
    %v1581 = vxor.u32 %v1580, 2147483648
    %v1582 = vmul.f32 %v1581, 1.442695
    %v1583 = vpow.pop %v1582
    %v1584 = vadd.f32 %v1583, 1.0
    %v1585 = vrcp.pop %v1584
    %v1586 = vmul.f32 1.0, %v1585
    %v1587 = vtanh.pop %v1580
    %v1588 = vmul.f32 %v1586, %v1494
    %1590 = vrot.lane.b32.xlu0 %v1587, 64
    %v1591 = vpop.permute.xlu0 %1590
    %v1593 = vmul.f32 %v1586, %v1591
    %1595 = vrot.lane.b32.xlu0 %v1593, 32
    %v1596 = vpop.permute.xlu0 %1595
    %v1598 = vadd.f32 %v1588, %v1596
    %v1599 = vtanh.pop %v1598
    %1601 = vrot.lane.b32.xlu0 %v1599, 64
    %v1602 = vpop.permute.xlu0 %1601
    %v1604 = vmul.f32 %v1586, %v1602
    %1606 = vrot.lane.b32.xlu0 %v1604, 32
    %v1607 = vpop.permute.xlu0 %1606
    %s1609 = scalar_lea.vmem %s7, 24
    %1610 = vst.msk [vmem:[%s1609] sm:$0xff] %vm199, %v1607
    %v1611 = vld [vmem:[%s618] sm:$0xff]
    %v1612 = vsel %vm199, %v1607, 0
    %1614 = vmatprep.subr.mxu0 0.0
    %1615 = vmatpush1.msra.mxu0 0.0
    %1616 = vmatprep.subr.mxu0 0.0
    %1617 = vmatpush1.msra.mxu0 0.0
    %1618 = vmatprep.subr.mxu0 0.0
    %1619 = vmatpush1.msra.mxu0 0.0
    %1620 = vmatprep.subr.mxu0 0.0
    %1621 = vmatpush1.msra.mxu0 0.0
    %1622 = vmatprep.subr.mxu0 0.0
    %1623 = vmatpush1.msra.mxu0 0.0
    %1624 = vmatprep.subr.mxu0 0.0
    %1625 = vmatpush1.msra.mxu0 0.0
    %1626 = vmatprep.subr.mxu0 0.0
    %1627 = vmatpush1.msra.mxu0 0.0
    %1628 = vmatprep.subr.mxu0 0.0
    %1629 = vmatpush1.msra.mxu0 0.0
    %1630 = vmatprep.subr.mxu0 0.0
    %1631 = vmatpush1.msra.mxu0 0.0
    %1632 = vmatprep.subr.mxu0 0.0
    %1633 = vmatpush1.msra.mxu0 0.0
    %1634 = vmatprep.subr.mxu0 0.0
    %1635 = vmatpush1.msra.mxu0 0.0
    %1636 = vmatprep.subr.mxu0 0.0
    %1637 = vmatpush1.msra.mxu0 0.0
    %1638 = vmatprep.subr.mxu0 0.0
    %1639 = vmatpush1.msra.mxu0 %v1197
    %1640 = vmatprep.subr.mxu0 0.0
    %1641 = vmatpush1.msra.mxu0 %v1196
    %1642 = vmatprep.subr.mxu0 0.0
    %1643 = vmatpush1.msra.mxu0 %v1195
    %1644 = vmatprep.subr.mxu0 0.0
    %1645 = vmatpush1.msra.mxu0 %v1194
    %1646 = vmatprep.subr.mxu0 0.0
    %1647 = vmatpush2.msra.mxu0 0.0
    %1648 = vmatprep.subr.mxu0 0.0
    %1649 = vmatpush2.msra.mxu0 0.0
    %1650 = vmatprep.subr.mxu0 0.0
    %1651 = vmatpush2.msra.mxu0 0.0
    %1652 = vmatprep.subr.mxu0 0.0
    %1653 = vmatpush2.msra.mxu0 0.0
    %1654 = vmatprep.subr.mxu0 0.0
    %1655 = vmatpush2.msra.mxu0 0.0
    %1656 = vmatprep.subr.mxu0 0.0
    %1657 = vmatpush2.msra.mxu0 0.0
    %1658 = vmatprep.subr.mxu0 0.0
    %1659 = vmatpush2.msra.mxu0 0.0
    %1660 = vmatprep.subr.mxu0 0.0
    %1661 = vmatpush2.msra.mxu0 0.0
    %1662 = vmatprep.subr.mxu0 0.0
    %1663 = vmatpush2.msra.mxu0 0.0
    %1664 = vmatprep.subr.mxu0 0.0
    %1665 = vmatpush2.msra.mxu0 0.0
    %1666 = vmatprep.subr.mxu0 0.0
    %1667 = vmatpush2.msra.mxu0 0.0
    %1668 = vmatprep.subr.mxu0 0.0
    %1669 = vmatpush2.msra.mxu0 0.0
    %1670 = vmatprep.subr.mxu0 0.0
    %1671 = vmatpush2.msra.mxu0 0.0
    %1672 = vmatprep.subr.mxu0 0.0
    %1673 = vmatpush2.msra.mxu0 0.0
    %1674 = vmatprep.subr.mxu0 0.0
    %1675 = vmatpush2.msra.mxu0 0.0
    %1676 = vmatprep.subr.mxu0 0.0
    %1677 = vmatpush2.msra.mxu0 0.0
    %1678 = vmatprep.mubr.f32.mxu0 0.0
    %1679 = vmatmul.mubr.f32.gmra.mxu0 %v1612
    %v1680 = vpop.f32.mrf.mxu0
    %v1681 = vadd.f32 0.0, %v1680
    %v1682 = vpop.f32.mrf.mxu0
    %1683 = vdwg.mxu0
    %v1684 = vadd.f32 %v1611, %v1681
    %v1685 = vxor.u32 %v1684, 2147483648
    %v1686 = vmul.f32 %v1685, 1.442695
    %v1687 = vpow.pop %v1686
    %v1688 = vadd.f32 %v1687, 1.0
    %v1689 = vrcp.pop %v1688
    %v1690 = vmul.f32 1.0, %v1689
    %v1691 = vtanh.pop %v1684
    %v1692 = vmul.f32 %v1690, %v1598
    %1694 = vrot.lane.b32.xlu0 %v1691, 64
    %v1695 = vpop.permute.xlu0 %1694
    %v1697 = vmul.f32 %v1690, %v1695
    %1699 = vrot.lane.b32.xlu0 %v1697, 32
    %v1700 = vpop.permute.xlu0 %1699
    %v1702 = vadd.f32 %v1692, %v1700
    %v1703 = vtanh.pop %v1702
    %1705 = vrot.lane.b32.xlu0 %v1703, 64
    %v1706 = vpop.permute.xlu0 %1705
    %v1708 = vmul.f32 %v1690, %v1706
    %1710 = vrot.lane.b32.xlu0 %v1708, 32
    %v1711 = vpop.permute.xlu0 %1710
    %s1713 = scalar_lea.vmem %s7, 32
    %1714 = vst.msk [vmem:[%s1713] sm:$0xff] %vm199, %v1711
    %v1715 = vld [vmem:[%s723] sm:$0xff]
    %v1716 = vsel %vm199, %v1711, 0
    %1718 = vmatprep.subr.mxu0 0.0
    %1719 = vmatpush1.msra.mxu0 0.0
    %1720 = vmatprep.subr.mxu0 0.0
    %1721 = vmatpush1.msra.mxu0 0.0
    %1722 = vmatprep.subr.mxu0 0.0
    %1723 = vmatpush1.msra.mxu0 0.0
    %1724 = vmatprep.subr.mxu0 0.0
    %1725 = vmatpush1.msra.mxu0 0.0
    %1726 = vmatprep.subr.mxu0 0.0
    %1727 = vmatpush1.msra.mxu0 0.0
    %1728 = vmatprep.subr.mxu0 0.0
    %1729 = vmatpush1.msra.mxu0 0.0
    %1730 = vmatprep.subr.mxu0 0.0
    %1731 = vmatpush1.msra.mxu0 0.0
    %1732 = vmatprep.subr.mxu0 0.0
    %1733 = vmatpush1.msra.mxu0 0.0
    %1734 = vmatprep.subr.mxu0 0.0
    %1735 = vmatpush1.msra.mxu0 0.0
    %1736 = vmatprep.subr.mxu0 0.0
    %1737 = vmatpush1.msra.mxu0 0.0
    %1738 = vmatprep.subr.mxu0 0.0
    %1739 = vmatpush1.msra.mxu0 0.0
    %1740 = vmatprep.subr.mxu0 0.0
    %1741 = vmatpush1.msra.mxu0 0.0
    %1742 = vmatprep.subr.mxu0 0.0
    %1743 = vmatpush1.msra.mxu0 %v1197
    %1744 = vmatprep.subr.mxu0 0.0
    %1745 = vmatpush1.msra.mxu0 %v1196
    %1746 = vmatprep.subr.mxu0 0.0
    %1747 = vmatpush1.msra.mxu0 %v1195
    %1748 = vmatprep.subr.mxu0 0.0
    %1749 = vmatpush1.msra.mxu0 %v1194
    %1750 = vmatprep.subr.mxu0 0.0
    %1751 = vmatpush2.msra.mxu0 0.0
    %1752 = vmatprep.subr.mxu0 0.0
    %1753 = vmatpush2.msra.mxu0 0.0
    %1754 = vmatprep.subr.mxu0 0.0
    %1755 = vmatpush2.msra.mxu0 0.0
    %1756 = vmatprep.subr.mxu0 0.0
    %1757 = vmatpush2.msra.mxu0 0.0
    %1758 = vmatprep.subr.mxu0 0.0
    %1759 = vmatpush2.msra.mxu0 0.0
    %1760 = vmatprep.subr.mxu0 0.0
    %1761 = vmatpush2.msra.mxu0 0.0
    %1762 = vmatprep.subr.mxu0 0.0
    %1763 = vmatpush2.msra.mxu0 0.0
    %1764 = vmatprep.subr.mxu0 0.0
    %1765 = vmatpush2.msra.mxu0 0.0
    %1766 = vmatprep.subr.mxu0 0.0
    %1767 = vmatpush2.msra.mxu0 0.0
    %1768 = vmatprep.subr.mxu0 0.0
    %1769 = vmatpush2.msra.mxu0 0.0
    %1770 = vmatprep.subr.mxu0 0.0
    %1771 = vmatpush2.msra.mxu0 0.0
    %1772 = vmatprep.subr.mxu0 0.0
    %1773 = vmatpush2.msra.mxu0 0.0
    %1774 = vmatprep.subr.mxu0 0.0
    %1775 = vmatpush2.msra.mxu0 0.0
    %1776 = vmatprep.subr.mxu0 0.0
    %1777 = vmatpush2.msra.mxu0 0.0
    %1778 = vmatprep.subr.mxu0 0.0
    %1779 = vmatpush2.msra.mxu0 0.0
    %1780 = vmatprep.subr.mxu0 0.0
    %1781 = vmatpush2.msra.mxu0 0.0
    %1782 = vmatprep.mubr.f32.mxu0 0.0
    %1783 = vmatmul.mubr.f32.gmra.mxu0 %v1716
    %v1784 = vpop.f32.mrf.mxu0
    %v1785 = vadd.f32 0.0, %v1784
    %v1786 = vpop.f32.mrf.mxu0
    %1787 = vdwg.mxu0
    %v1788 = vadd.f32 %v1715, %v1785
    %v1789 = vxor.u32 %v1788, 2147483648
    %v1790 = vmul.f32 %v1789, 1.442695
    %v1791 = vpow.pop %v1790
    %v1792 = vadd.f32 %v1791, 1.0
    %v1793 = vrcp.pop %v1792
    %v1794 = vmul.f32 1.0, %v1793
    %v1795 = vtanh.pop %v1788
    %v1796 = vmul.f32 %v1794, %v1702
    %1798 = vrot.lane.b32.xlu0 %v1795, 64
    %v1799 = vpop.permute.xlu0 %1798
    %v1801 = vmul.f32 %v1794, %v1799
    %1803 = vrot.lane.b32.xlu0 %v1801, 32
    %v1804 = vpop.permute.xlu0 %1803
    %v1806 = vadd.f32 %v1796, %v1804
    %v1807 = vtanh.pop %v1806
    %1809 = vrot.lane.b32.xlu0 %v1807, 64
    %v1810 = vpop.permute.xlu0 %1809
    %v1812 = vmul.f32 %v1794, %v1810
    %1814 = vrot.lane.b32.xlu0 %v1812, 32
    %v1815 = vpop.permute.xlu0 %1814
    %s1817 = scalar_lea.vmem %s7, 40
    %1818 = vst.msk [vmem:[%s1817] sm:$0xff] %vm199, %v1815
    %v1819 = vld [vmem:[%s828] sm:$0xff]
    %v1820 = vsel %vm199, %v1815, 0
    %1822 = vmatprep.subr.mxu0 0.0
    %1823 = vmatpush1.msra.mxu0 0.0
    %1824 = vmatprep.subr.mxu0 0.0
    %1825 = vmatpush1.msra.mxu0 0.0
    %1826 = vmatprep.subr.mxu0 0.0
    %1827 = vmatpush1.msra.mxu0 0.0
    %1828 = vmatprep.subr.mxu0 0.0
    %1829 = vmatpush1.msra.mxu0 0.0
    %1830 = vmatprep.subr.mxu0 0.0
    %1831 = vmatpush1.msra.mxu0 0.0
    %1832 = vmatprep.subr.mxu0 0.0
    %1833 = vmatpush1.msra.mxu0 0.0
    %1834 = vmatprep.subr.mxu0 0.0
    %1835 = vmatpush1.msra.mxu0 0.0
    %1836 = vmatprep.subr.mxu0 0.0
    %1837 = vmatpush1.msra.mxu0 0.0
    %1838 = vmatprep.subr.mxu0 0.0
    %1839 = vmatpush1.msra.mxu0 0.0
    %1840 = vmatprep.subr.mxu0 0.0
    %1841 = vmatpush1.msra.mxu0 0.0
    %1842 = vmatprep.subr.mxu0 0.0
    %1843 = vmatpush1.msra.mxu0 0.0
    %1844 = vmatprep.subr.mxu0 0.0
    %1845 = vmatpush1.msra.mxu0 0.0
    %1846 = vmatprep.subr.mxu0 0.0
    %1847 = vmatpush1.msra.mxu0 %v1197
    %1848 = vmatprep.subr.mxu0 0.0
    %1849 = vmatpush1.msra.mxu0 %v1196
    %1850 = vmatprep.subr.mxu0 0.0
    %1851 = vmatpush1.msra.mxu0 %v1195
    %1852 = vmatprep.subr.mxu0 0.0
    %1853 = vmatpush1.msra.mxu0 %v1194
    %1854 = vmatprep.subr.mxu0 0.0
    %1855 = vmatpush2.msra.mxu0 0.0
    %1856 = vmatprep.subr.mxu0 0.0
    %1857 = vmatpush2.msra.mxu0 0.0
    %1858 = vmatprep.subr.mxu0 0.0
    %1859 = vmatpush2.msra.mxu0 0.0
    %1860 = vmatprep.subr.mxu0 0.0
    %1861 = vmatpush2.msra.mxu0 0.0
    %1862 = vmatprep.subr.mxu0 0.0
    %1863 = vmatpush2.msra.mxu0 0.0
    %1864 = vmatprep.subr.mxu0 0.0
    %1865 = vmatpush2.msra.mxu0 0.0
    %1866 = vmatprep.subr.mxu0 0.0
    %1867 = vmatpush2.msra.mxu0 0.0
    %1868 = vmatprep.subr.mxu0 0.0
    %1869 = vmatpush2.msra.mxu0 0.0
    %1870 = vmatprep.subr.mxu0 0.0
    %1871 = vmatpush2.msra.mxu0 0.0
    %1872 = vmatprep.subr.mxu0 0.0
    %1873 = vmatpush2.msra.mxu0 0.0
    %1874 = vmatprep.subr.mxu0 0.0
    %1875 = vmatpush2.msra.mxu0 0.0
    %1876 = vmatprep.subr.mxu0 0.0
    %1877 = vmatpush2.msra.mxu0 0.0
    %1878 = vmatprep.subr.mxu0 0.0
    %1879 = vmatpush2.msra.mxu0 0.0
    %1880 = vmatprep.subr.mxu0 0.0
    %1881 = vmatpush2.msra.mxu0 0.0
    %1882 = vmatprep.subr.mxu0 0.0
    %1883 = vmatpush2.msra.mxu0 0.0
    %1884 = vmatprep.subr.mxu0 0.0
    %1885 = vmatpush2.msra.mxu0 0.0
    %1886 = vmatprep.mubr.f32.mxu0 0.0
    %1887 = vmatmul.mubr.f32.gmra.mxu0 %v1820
    %v1888 = vpop.f32.mrf.mxu0
    %v1889 = vadd.f32 0.0, %v1888
    %v1890 = vpop.f32.mrf.mxu0
    %1891 = vdwg.mxu0
    %v1892 = vadd.f32 %v1819, %v1889
    %v1893 = vxor.u32 %v1892, 2147483648
    %v1894 = vmul.f32 %v1893, 1.442695
    %v1895 = vpow.pop %v1894
    %v1896 = vadd.f32 %v1895, 1.0
    %v1897 = vrcp.pop %v1896
    %v1898 = vmul.f32 1.0, %v1897
    %v1899 = vtanh.pop %v1892
    %v1900 = vmul.f32 %v1898, %v1806
    %1902 = vrot.lane.b32.xlu0 %v1899, 64
    %v1903 = vpop.permute.xlu0 %1902
    %v1905 = vmul.f32 %v1898, %v1903
    %1907 = vrot.lane.b32.xlu0 %v1905, 32
    %v1908 = vpop.permute.xlu0 %1907
    %v1910 = vadd.f32 %v1900, %v1908
    %v1911 = vtanh.pop %v1910
    %1913 = vrot.lane.b32.xlu0 %v1911, 64
    %v1914 = vpop.permute.xlu0 %1913
    %v1916 = vmul.f32 %v1898, %v1914
    %1918 = vrot.lane.b32.xlu0 %v1916, 32
    %v1919 = vpop.permute.xlu0 %1918
    %s1921 = scalar_lea.vmem %s7, 48
    %1922 = vst.msk [vmem:[%s1921] sm:$0xff] %vm199, %v1919
    %v1923 = vld [vmem:[%s933] sm:$0xff]
    %v1924 = vsel %vm199, %v1919, 0
    %1926 = vmatprep.subr.mxu0 0.0
    %1927 = vmatpush1.msra.mxu0 0.0
    %1928 = vmatprep.subr.mxu0 0.0
    %1929 = vmatpush1.msra.mxu0 0.0
    %1930 = vmatprep.subr.mxu0 0.0
    %1931 = vmatpush1.msra.mxu0 0.0
    %1932 = vmatprep.subr.mxu0 0.0
    %1933 = vmatpush1.msra.mxu0 0.0
    %1934 = vmatprep.subr.mxu0 0.0
    %1935 = vmatpush1.msra.mxu0 0.0
    %1936 = vmatprep.subr.mxu0 0.0
    %1937 = vmatpush1.msra.mxu0 0.0
    %1938 = vmatprep.subr.mxu0 0.0
    %1939 = vmatpush1.msra.mxu0 0.0
    %1940 = vmatprep.subr.mxu0 0.0
    %1941 = vmatpush1.msra.mxu0 0.0
    %1942 = vmatprep.subr.mxu0 0.0
    %1943 = vmatpush1.msra.mxu0 0.0
    %1944 = vmatprep.subr.mxu0 0.0
    %1945 = vmatpush1.msra.mxu0 0.0
    %1946 = vmatprep.subr.mxu0 0.0
    %1947 = vmatpush1.msra.mxu0 0.0
    %1948 = vmatprep.subr.mxu0 0.0
    %1949 = vmatpush1.msra.mxu0 0.0
    %1950 = vmatprep.subr.mxu0 0.0
    %1951 = vmatpush1.msra.mxu0 %v1197
    %1952 = vmatprep.subr.mxu0 0.0
    %1953 = vmatpush1.msra.mxu0 %v1196
    %1954 = vmatprep.subr.mxu0 0.0
    %1955 = vmatpush1.msra.mxu0 %v1195
    %1956 = vmatprep.subr.mxu0 0.0
    %1957 = vmatpush1.msra.mxu0 %v1194
    %1958 = vmatprep.subr.mxu0 0.0
    %1959 = vmatpush2.msra.mxu0 0.0
    %1960 = vmatprep.subr.mxu0 0.0
    %1961 = vmatpush2.msra.mxu0 0.0
    %1962 = vmatprep.subr.mxu0 0.0
    %1963 = vmatpush2.msra.mxu0 0.0
    %1964 = vmatprep.subr.mxu0 0.0
    %1965 = vmatpush2.msra.mxu0 0.0
    %1966 = vmatprep.subr.mxu0 0.0
    %1967 = vmatpush2.msra.mxu0 0.0
    %1968 = vmatprep.subr.mxu0 0.0
    %1969 = vmatpush2.msra.mxu0 0.0
    %1970 = vmatprep.subr.mxu0 0.0
    %1971 = vmatpush2.msra.mxu0 0.0
    %1972 = vmatprep.subr.mxu0 0.0
    %1973 = vmatpush2.msra.mxu0 0.0
    %1974 = vmatprep.subr.mxu0 0.0
    %1975 = vmatpush2.msra.mxu0 0.0
    %1976 = vmatprep.subr.mxu0 0.0
    %1977 = vmatpush2.msra.mxu0 0.0
    %1978 = vmatprep.subr.mxu0 0.0
    %1979 = vmatpush2.msra.mxu0 0.0
    %1980 = vmatprep.subr.mxu0 0.0
    %1981 = vmatpush2.msra.mxu0 0.0
    %1982 = vmatprep.subr.mxu0 0.0
    %1983 = vmatpush2.msra.mxu0 0.0
    %1984 = vmatprep.subr.mxu0 0.0
    %1985 = vmatpush2.msra.mxu0 0.0
    %1986 = vmatprep.subr.mxu0 0.0
    %1987 = vmatpush2.msra.mxu0 0.0
    %1988 = vmatprep.subr.mxu0 0.0
    %1989 = vmatpush2.msra.mxu0 0.0
    %1990 = vmatprep.mubr.f32.mxu0 0.0
    %1991 = vmatmul.mubr.f32.gmra.mxu0 %v1924
    %v1992 = vpop.f32.mrf.mxu0
    %v1993 = vadd.f32 0.0, %v1992
    %v1994 = vpop.f32.mrf.mxu0
    %1995 = vdwg.mxu0
    %v1996 = vadd.f32 %v1923, %v1993
    %v1997 = vxor.u32 %v1996, 2147483648
    %v1998 = vmul.f32 %v1997, 1.442695
    %v1999 = vpow.pop %v1998
    %v2000 = vadd.f32 %v1999, 1.0
    %v2001 = vrcp.pop %v2000
    %v2002 = vmul.f32 1.0, %v2001
    %v2003 = vtanh.pop %v1996
    %v2004 = vmul.f32 %v2002, %v1910
    %2006 = vrot.lane.b32.xlu0 %v2003, 64
    %v2007 = vpop.permute.xlu0 %2006
    %v2009 = vmul.f32 %v2002, %v2007
    %2011 = vrot.lane.b32.xlu0 %v2009, 32
    %v2012 = vpop.permute.xlu0 %2011
    %v2014 = vadd.f32 %v2004, %v2012
    %v2015 = vtanh.pop %v2014
    %2017 = vrot.lane.b32.xlu0 %v2015, 64
    %v2018 = vpop.permute.xlu0 %2017
    %v2020 = vmul.f32 %v2002, %v2018
    %2022 = vrot.lane.b32.xlu0 %v2020, 32
    %v2023 = vpop.permute.xlu0 %2022
    %s2025 = scalar_lea.vmem %s7, 56
    %2026 = vst.msk [vmem:[%s2025] sm:$0xff] %vm199, %v2023
    // Predicated region
    $region34: #{tpu_custom_call.1} parent=1 // pred_check
      _
    $region35: #{tpu_custom_call.1} parent=1 // pred_check_branch
      %2028 = sbr.rel (0) target = $region37
    $region36: #{tpu_custom_call.1} parent=1 // pred_region
      _
    $region37: #{tpu_custom_call.1} parent=1 // pred_fallthru
      _
    // Predicated region
    $region38: #{tpu_custom_call.1} parent=1 // pred_check
      _
    $region39: #{tpu_custom_call.1} parent=1 // pred_check_branch
      %2030 = sbr.rel (0) target = $region41
    $region40: #{tpu_custom_call.1} parent=1 // pred_region
      _
    $region41: #{tpu_custom_call.1} parent=1 // pred_fallthru
      _
    %2031 = vsyncpa [#allocation5], 1

</llo_original>
